<compile_context>
chip_gen: v7x
topology: tpu7x:2x2x1
jax: 0.10.0
libtpu: 0.0.40
codegen_flags: <defaults>
</compile_context>

<pallas_src>
import math
import jax
import jax.numpy as jnp
from jax import lax
from jax.experimental import pallas as pl
from jax.experimental.pallas import tpu as pltpu

# ----------------------------- config ---------------------------------------
B, T = 2, 8
BT = B * T
EMBED = 32                    # decoder_embed_dim
VALUE = 64                    # decoder_value_embed_dim
HEADS = 2                     # decoder_retention_heads
KDIM = EMBED // HEADS         # key_dim per head  = 16
VDIM = VALUE // HEADS         # head_dim (value)  = 32
FFN = 64                      # decoder_ffn_embed_dim
EPS = 1e-6                    # layernorm_eps (RMSNorm)
LN_EPS = 1e-5                 # nn.LayerNorm default eps (AdaptiveLayerNorm)
ALPHA = 1.0                   # deepnorm=False
SCALING = KDIM ** -0.5
PROJ_A = 2 * EMBED + VALUE    # 128 : width of the [q|k|v] block
PROJ_N = 2 * PROJ_A + 2 * VALUE   # 384 : fused projection columns


# --------------------------- kernel helpers ----------------------------------
def _rmsnorm(x, w, eps):
    return x * lax.rsqrt(jnp.mean(x * x, axis=-1, keepdims=True) + eps) * w


def _layernorm_noaffine(x, eps):
    mu = jnp.mean(x, axis=-1, keepdims=True)
    xc = x - mu
    var = jnp.mean(xc * xc, axis=-1, keepdims=True)
    return xc * lax.rsqrt(var + eps)


def _silu(x):
    return x * jax.nn.sigmoid(x)


# ------------------------------ kernel ---------------------------------------
def retnet_layer_kernel(
    x_ref, sty_ref, cos_ref, sin_ref, mask_ref, kvmask_ref,
    w_all_ref, wo_ref, w_rln_ref, w_fln_ref,
    w_style_ref, b_style_ref, w_glu_ref, wfc2_ref,
    out_ref, kv_ref,
    normed_sc,
):
    x = x_ref[...]                                          # (BT, EMBED)
    residual = x

    # retention_layer_norm (RMSNorm, affine) -- normalize_before=True
    hn = _rmsnorm(x, w_rln_ref[...], EPS)

    # fused projection: columns [q|k*s|v][qR|kR*s|g][v|v]  -> (BT, 384)
    proj = jnp.dot(hn, w_all_ref[...], preferred_element_type=jnp.float32)

    # full-vreg theta shift: [q|k|v]*[cos|cos|1] + [qR|kR|g]*[sin|sin|0]
    shifted = proj[:, :PROJ_A] * cos_ref[...] + proj[:, PROJ_A:2 * PROJ_A] * sin_ref[...]
    qr = shifted[:, :EMBED]                                 # (BT, 32)
    kr = shifted[:, EMBED:2 * EMBED]                        # (BT, 32), scaling pre-folded
    v = shifted[:, 2 * EMBED:]                              # (BT, 64), passthrough lanes
    g = proj[:, PROJ_A + 2 * EMBED:2 * PROJ_A]              # (BT, 64)
    vv = proj[:, 2 * PROJ_A:]                               # (BT, 128) = [v | v]

    # ---- eval-mode kv cache: ONE lane-dense matmul for both batches & heads ----
    # kvmask = intra-decay (per head-lane-block) * batch block-diagonal; kept diagonal
    # head blocks carry the correct intra factor, off-diagonal blocks are discarded.
    kv_ref[...] = lax.dot_general(kr, vv * kvmask_ref[...],
                                  (((0,), (0,)), ((), ())),
                                  preferred_element_type=jnp.float32)   # (EMBED, B*VALUE)

    # ---- per-head retention (tiny matmuls, latency-bound; keep the simple loop) ----
    for h in range(HEADS):
        qh = qr[:, h * KDIM:(h + 1) * KDIM]                 # (BT, KDIM)
        kh = kr[:, h * KDIM:(h + 1) * KDIM]
        vh = v[:, h * VDIM:(h + 1) * VDIM]                  # (BT, VDIM)

        # both batches at once; decay mask is block-diagonal in batch
        s = lax.dot_general(qh, kh, (((1,), (1,)), ((), ())),
                            preferred_element_type=jnp.float32)          # (BT, BT)
        s = s * mask_ref[h]
        denom = jnp.maximum(jnp.abs(jnp.sum(s, axis=-1, keepdims=True)), 1.0)
        ret = s * pl.reciprocal(denom, approx=True)         # use_softmax=False branch
        oh = jnp.dot(ret, vh, preferred_element_type=jnp.float32)        # (BT, VDIM)

        # group_norm: RMSNorm over head_dim, no affine; write at lane offset
        nh = oh * lax.rsqrt(jnp.mean(oh * oh, axis=-1, keepdims=True) + EPS)
        normed_sc[:, h * VDIM:(h + 1) * VDIM] = nh

    msr = jnp.dot(_silu(g) * normed_sc[...], wo_ref[...],
                  preferred_element_type=jnp.float32)       # (BT, EMBED)

    # fused adaln_1 | adaln_2 style projection (sty pre-repeated to BT rows)
    st = jnp.dot(sty_ref[...], w_style_ref[...],
                 preferred_element_type=jnp.float32) + b_style_ref[...]   # (BT, 128)

    # residual + adaln_1
    h1 = residual * ALPHA + msr
    ln1 = _layernorm_noaffine(h1, LN_EPS)
    h1 = st[:, :EMBED] * ln1 + st[:, EMBED:2 * EMBED]

    # ---------------- FFN block (GLU, swish), gate|fc1 fused -----------------
    res2 = h1
    h2 = _rmsnorm(h1, w_fln_ref[...], EPS)                  # final_layer_norm
    ga = jnp.dot(h2, w_glu_ref[...], preferred_element_type=jnp.float32)  # (BT, 2*FFN)
    ff = jnp.dot(_silu(ga[:, FFN:]) * ga[:, :FFN], wfc2_ref[...],
                 preferred_element_type=jnp.float32)        # (BT, EMBED)
    h3 = res2 * ALPHA + ff

    # adaln_2
    ln2 = _layernorm_noaffine(h3, LN_EPS)
    out_ref[...] = st[:, 2 * EMBED:3 * EMBED] * ln2 + st[:, 3 * EMBED:]


# ----------------------- one-time host-side preparation -----------------------
def _rotate_matrix(dim):
    # y = x @ R  ==  rotate_every_two(x): y[2i] = -x[2i+1], y[2i+1] = x[2i]
    ev = jnp.arange(0, dim, 2)
    r = jnp.zeros((dim, dim), jnp.float32)
    r = r.at[ev + 1, ev].set(-1.0)
    r = r.at[ev, ev + 1].set(1.0)
    return r


def prepare_layer(params, rel_pos):
    """All weight / positional fusion hoisted OUT of the per-call path (run once)."""
    (sin, cos), (mask, intra, scale) = rel_pos
    rot = _rotate_matrix(EMBED)
    wk_s = params["wk"] * SCALING                          # fold key scaling into weights
    w_all = jnp.concatenate(
        [params["wq"], wk_s, params["wv"],                 # block A  [q | k | v]
         params["wq"] @ rot, wk_s @ rot, params["wg"],     # block B  [qR | kR | g]
         params["wv"], params["wv"]], axis=1)              # block C  [v | v] (kv path)

    cos_h = jnp.tile(cos, (1, HEADS))                      # (T, EMBED)
    sin_h = jnp.tile(sin, (1, HEADS))
    cos_pad = jnp.concatenate([jnp.tile(cos_h, (B, 2)),
                               jnp.ones((BT, VALUE), jnp.float32)], axis=1)   # (BT, 128)
    sin_pad = jnp.concatenate([jnp.tile(sin_h, (B, 2)),
                               jnp.zeros((BT, VALUE), jnp.float32)], axis=1)

    # block-diagonal (in batch) decay mask.  Valid only for the use_softmax=False
    # sum-normalization path; softmax over a BT row would mix batches.
    mask_blk = jnp.zeros((HEADS, BT, BT), jnp.float32)
    for b in range(B):
        mask_blk = mask_blk.at[:, b * T:(b + 1) * T, b * T:(b + 1) * T].set(mask)

    # kv mask: intra-decay replicated per head lane-block, batch block-diagonal
    intra_rep = jnp.repeat(intra[:, :, 0].T, VDIM, axis=1)  # (T, VALUE)
    kvmask = jnp.zeros((BT, B * VALUE), jnp.float32)
    for b in range(B):
        kvmask = kvmask.at[b * T:(b + 1) * T, b * VALUE:(b + 1) * VALUE].set(intra_rep)

    return {
        "w_all": w_all, "cos_pad": cos_pad, "sin_pad": sin_pad,
        "mask_blk": mask_blk, "kvmask": kvmask,
        "wo": params["wo"], "w_rln": params["w_rln"], "w_fln": params["w_fln"],
        "w_style": jnp.concatenate([params["ws1"], params["ws2"]], axis=1),   # (32, 128)
        "b_style": jnp.concatenate([params["bs1"], params["bs2"]], axis=1),   # (1, 128)
        "w_glu": jnp.concatenate([params["wgate"], params["wfc1"]], axis=1),  # (32, 128)
        "wfc2": params["wfc2"],
        "scale": scale,
    }


# ------------------------------ per-call path ---------------------------------
@jax.jit
def retnet_decoder_layer(x, sty, prep):
    """x: (B,T,EMBED) f32; sty: (B,EMBED) f32; prep: output of prepare_layer."""
    x2 = x.reshape(BT, EMBED)
    sty_rep = jnp.repeat(sty, T, axis=0)                    # (BT, EMBED)

    out2, kv_packed = pl.pallas_call(
        retnet_layer_kernel,
        out_shape=(
            jax.ShapeDtypeStruct((BT, EMBED), jnp.float32),
            jax.ShapeDtypeStruct((EMBED, B * VALUE), jnp.float32),   # lane-dense kv slab
        ),
        scratch_shapes=[pltpu.VMEM((BT, VALUE), jnp.float32)],
    )(
        x2, sty_rep, prep["cos_pad"], prep["sin_pad"], prep["mask_blk"], prep["kvmask"],
        prep["w_all"], prep["wo"], prep["w_rln"], prep["w_fln"],
        prep["w_style"], prep["b_style"], prep["w_glu"], prep["wfc2"],
    )

    hidden = out2.reshape(B, T, EMBED)
    # unpack kv slab: kv_packed[h*KDIM+dk, b*VALUE + h*VDIM + dv] -> prev_kv[b,h,dv,dk]
    r = kv_packed.reshape(HEADS, KDIM, B, HEADS, VDIM)
    prev_kv = jnp.stack([r[h, :, :, h, :] for h in range(HEADS)], axis=0)  # (H,KDIM,B,VDIM)
    prev_kv = prev_kv.transpose(2, 0, 3, 1)                                # (B,H,VDIM,KDIM)
    # TODO(synk): output_retentions / retention_weights output not returned.
    return hidden, prev_kv


# ------------------- rel_pos (parallel retention) -----------------------------
def build_rel_pos():
    decay = jnp.log(1.0 - 2.0 ** (-5.0 - jnp.arange(HEADS, dtype=jnp.float32)))
    angle = 1.0 / (10000.0 ** jnp.linspace(0.0, 1.0, KDIM // 2))
    angle = jnp.repeat(angle, 2)                                  # (KDIM,)
    index = jnp.arange(T, dtype=jnp.float32)
    sin = jnp.sin(index[:, None] * angle[None, :]).astype(jnp.float32)
    cos = jnp.cos(index[:, None] * angle[None, :]).astype(jnp.float32)

    diff = index[:, None] - index[None, :]                        # (T, T)
    tril = diff >= 0.0
    m = jnp.where(tril[None], jnp.exp(diff[None] * decay[:, None, None]), 0.0)
    scale_raw = jnp.sqrt(jnp.sum(m, axis=-1, keepdims=True))      # (HEADS, T, 1)
    m = m / scale_raw                                             # (HEADS, T, T)
    intra = m[:, -1, :][:, :, None]                               # (HEADS, T, 1)
    scale = scale_raw[None]                                       # (1, HEADS, T, 1)
    return (sin, cos), (m.astype(jnp.float32), intra.astype(jnp.float32),
                        scale.astype(jnp.float32))


# --------------------------- parameter init -----------------------------------
def xavier(key, shape, gain=1.0):
    fan_in, fan_out = shape
    a = gain * math.sqrt(6.0 / (fan_in + fan_out))
    return jax.random.uniform(key, shape, jnp.float32, -a, a)


def init_params(key):
    ks = jax.random.split(key, 12)
    g = 2.0 ** -2.5
    params = {
        "wq": xavier(ks[0], (EMBED, EMBED), g),
        "wk": xavier(ks[1], (EMBED, EMBED), g),
        "wv": xavier(ks[2], (EMBED, VALUE), g),
        "wg": xavier(ks[3], (EMBED, VALUE), g),
        "wo": xavier(ks[4], (VALUE, EMBED), 1.0),
        "w_rln": jnp.ones((1, EMBED), jnp.float32),
        "w_fln": jnp.ones((1, EMBED), jnp.float32),
        # TODO(synk): AdaptiveLayerNorm class not in the snippet; implemented the standard
        # style-adaptive LN: (gamma, beta) = Linear(sty), out = gamma*LN(x)+beta,
        # bias initialized so gamma=1, beta=0.
        "ws1": xavier(ks[5], (EMBED, 2 * EMBED), 0.1),
        "bs1": jnp.concatenate(
            [jnp.ones((1, EMBED), jnp.float32), jnp.zeros((1, EMBED), jnp.float32)], -1),
        "ws2": xavier(ks[6], (EMBED, 2 * EMBED), 0.1),
        "bs2": jnp.concatenate(
            [jnp.ones((1, EMBED), jnp.float32), jnp.zeros((1, EMBED), jnp.float32)], -1),
        "wgate": xavier(ks[7], (EMBED, FFN), 1.0),
        "wfc1": xavier(ks[8], (EMBED, FFN), 1.0),
        "wfc2": xavier(ks[9], (FFN, EMBED), 1.0),
    }
    return params


# ---------------------- pure-JAX reference (PyTorch semantics) -----------------
def reference_forward(x, sty, rel_pos, params):
    (sin, cos), (mask, intra, _) = rel_pos
    h = x * lax.rsqrt(jnp.mean(x * x, -1, keepdims=True) + EPS) * params["w_rln"][0]
    q = h @ params["wq"]; k = h @ params["wk"]
    v = h @ params["wv"]; g = h @ params["wg"]

    def split(t, d):
        return t.reshape(B, T, HEADS, d).transpose(0, 2, 1, 3)

    q, k, v = split(q, KDIM), split(k, KDIM), split(v, VDIM)
    k = k * SCALING

    def rot(t):
        x1 = t[..., ::2]; x2 = t[..., 1::2]
        return jnp.stack([-x2, x1], axis=-1).reshape(t.shape)

    qr = q * cos + rot(q) * sin
    kr = k * cos + rot(k) * sin

    ret = jnp.einsum('bhtd,bhsd->bhts', qr, kr) * mask[None]
    ret = ret / jnp.clip(jnp.abs(ret.sum(-1, keepdims=True)), 1.0, None)
    o = jnp.einsum('bhts,bhsd->bhtd', ret, v)
    kv = jnp.einsum('bhtk,bhtv,ht->bhvk', kr, v, intra[:, :, 0])

    o = o.transpose(0, 2, 1, 3)                                   # (B, T, H, VDIM)
    normed = o * lax.rsqrt(jnp.mean(o * o, -1, keepdims=True) + EPS)
    normed = normed.reshape(B, T, VALUE)
    msr = (jax.nn.silu(g) * normed) @ params["wo"]

    def adaln(z, w, b):
        gb = sty @ w + b
        gamma, beta = gb[:, :EMBED], gb[:, EMBED:]
        mu = z.mean(-1, keepdims=True); xc = z - mu
        ln = xc * lax.rsqrt(jnp.mean(xc * xc, -1, keepdims=True) + LN_EPS)
        return gamma[:, None, :] * ln + beta[:, None, :]

    h1 = adaln(x * ALPHA + msr, params["ws1"], params["bs1"][0])
    res2 = h1
    h2 = h1 * lax.rsqrt(jnp.mean(h1 * h1, -1, keepdims=True) + EPS) * params["w_fln"][0]
    ff = (jax.nn.silu(h2 @ params["wfc1"]) * (h2 @ params["wgate"])) @ params["wfc2"]
    h3 = adaln(res2 * ALPHA + ff, params["ws2"], params["bs2"][0])
    return h3, kv


# ------------------------------- main -----------------------------------------
if __name__ == "__main__":
    key = jax.random.PRNGKey(0)
    kx, ks, kp = jax.random.split(key, 3)
    x = jax.random.normal(kx, (B, T, EMBED), jnp.float32)
    sty = jax.random.normal(ks, (B, EMBED), jnp.float32)
    params = init_params(kp)
    rel_pos = build_rel_pos()

    prep = prepare_layer(params, rel_pos)          # one-time; NOT on the per-call path
    hidden, prev_kv = retnet_decoder_layer(x, sty, prep)
    jax.block_until_ready((hidden, prev_kv))
    curr_kv = {"prev_key_value": prev_kv, "scale": prep["scale"]}

    hidden_ref, kv_ref_host = reference_forward(x, sty, rel_pos, params)

    assert hidden.shape == (B, T, EMBED)
    assert curr_kv["prev_key_value"].shape == (B, HEADS, VDIM, KDIM)
    assert bool(jnp.all(jnp.isfinite(hidden)))
    assert bool(jnp.all(jnp.isfinite(prev_kv)))
    # generous tolerance: pl.reciprocal(approx=True) error largely cancels in group-norm
    assert bool(jnp.allclose(hidden, hidden_ref, rtol=2e-2, atol=2e-2))
    assert bool(jnp.allclose(prev_kv, kv_ref_host, rtol=2e-2, atol=2e-2))
    print("KERNEL_OK")
</pallas_src>

<mosaic_0001>
module attributes {stable_mosaic.version = 11 : i64} {
  func.func @retnet_layer_kernel(%arg0: memref<16x32xf32, #tpu.memory_space<vmem>>, %arg1: memref<16x32xf32, #tpu.memory_space<vmem>>, %arg2: memref<16x128xf32, #tpu.memory_space<vmem>>, %arg3: memref<16x128xf32, #tpu.memory_space<vmem>>, %arg4: memref<2x16x16xf32, #tpu.memory_space<vmem>>, %arg5: memref<16x128xf32, #tpu.memory_space<vmem>>, %arg6: memref<32x384xf32, #tpu.memory_space<vmem>>, %arg7: memref<64x32xf32, #tpu.memory_space<vmem>>, %arg8: memref<1x32xf32, #tpu.memory_space<vmem>>, %arg9: memref<1x32xf32, #tpu.memory_space<vmem>>, %arg10: memref<32x128xf32, #tpu.memory_space<vmem>>, %arg11: memref<1x128xf32, #tpu.memory_space<vmem>>, %arg12: memref<32x128xf32, #tpu.memory_space<vmem>>, %arg13: memref<64x32xf32, #tpu.memory_space<vmem>>, %arg14: memref<16x32xf32, #tpu.memory_space<vmem>>, %arg15: memref<32x128xf32, #tpu.memory_space<vmem>>, %arg16: memref<16x64xf32, #tpu.memory_space<vmem>>) attributes {dimension_semantics = [], scalar_prefetch = 0 : i64, scratch_operands = 1 : i64, tpu.core_type = #tpu.core_type<tc>} {
    %c0 = arith.constant 0 : index
    %c0_0 = arith.constant 0 : index
    %0 = vector.load %arg0[%c0, %c0_0] : memref<16x32xf32, #tpu.memory_space<vmem>>, vector<16x32xf32>
    %c0_1 = arith.constant 0 : index
    %c0_2 = arith.constant 0 : index
    %1 = vector.load %arg8[%c0_1, %c0_2] : memref<1x32xf32, #tpu.memory_space<vmem>>, vector<1x32xf32>
    %2 = arith.mulf %0, %0 : vector<16x32xf32>
    %cst = arith.constant dense<0.000000e+00> : vector<16xf32>
    %3 = vector.multi_reduction <add>, %2, %cst [1] : vector<16x32xf32> to vector<16xf32>
    %4 = vector.shape_cast %3 : vector<16xf32> to vector<16x1xf32>
    %cst_3 = arith.constant 3.200000e+01 : f32
    %5 = vector.broadcast %cst_3 : f32 to vector<16x1xf32>
    %6 = arith.divf %4, %5 : vector<16x1xf32>
    %cst_4 = arith.constant 9.99999997E-7 : f32
    %7 = vector.broadcast %cst_4 : f32 to vector<16x1xf32>
    %8 = arith.addf %6, %7 : vector<16x1xf32>
    %9 = math.rsqrt %8 : vector<16x1xf32>
    %10 = vector.broadcast %9 : vector<16x1xf32> to vector<16x32xf32>
    %11 = arith.mulf %0, %10 : vector<16x32xf32>
    %12 = vector.broadcast %1 : vector<1x32xf32> to vector<16x32xf32>
    %13 = arith.mulf %11, %12 : vector<16x32xf32>
    %c0_5 = arith.constant 0 : index
    %c0_6 = arith.constant 0 : index
    %14 = vector.load %arg6[%c0_5, %c0_6] : memref<32x384xf32, #tpu.memory_space<vmem>>, vector<32x384xf32>
    %cst_7 = arith.constant dense<0.000000e+00> : vector<16x384xf32>
    %15 = tpu.matmul %13, %14, %cst_7 {dimension_numbers = #tpu.dot_dimension_numbers<[1], [0], [0], [1], [0, 0, 1, 1], [], []>} : vector<16x32xf32>, vector<32x384xf32>, vector<16x384xf32> -> vector<16x384xf32>
    %16 = vector.extract_strided_slice %15 {offsets = [0, 0], sizes = [16, 128], strides = [1, 1]} : vector<16x384xf32> to vector<16x128xf32>
    %c0_8 = arith.constant 0 : index
    %c0_9 = arith.constant 0 : index
    %17 = vector.load %arg2[%c0_8, %c0_9] : memref<16x128xf32, #tpu.memory_space<vmem>>, vector<16x128xf32>
    %18 = arith.mulf %16, %17 : vector<16x128xf32>
    %19 = vector.extract_strided_slice %15 {offsets = [0, 128], sizes = [16, 128], strides = [1, 1]} : vector<16x384xf32> to vector<16x128xf32>
    %c0_10 = arith.constant 0 : index
    %c0_11 = arith.constant 0 : index
    %20 = vector.load %arg3[%c0_10, %c0_11] : memref<16x128xf32, #tpu.memory_space<vmem>>, vector<16x128xf32>
    %21 = arith.mulf %19, %20 : vector<16x128xf32>
    %22 = arith.addf %18, %21 : vector<16x128xf32>
    %23 = vector.extract_strided_slice %22 {offsets = [0, 0], sizes = [16, 32], strides = [1, 1]} : vector<16x128xf32> to vector<16x32xf32>
    %24 = vector.extract_strided_slice %22 {offsets = [0, 32], sizes = [16, 32], strides = [1, 1]} : vector<16x128xf32> to vector<16x32xf32>
    %25 = vector.extract_strided_slice %22 {offsets = [0, 64], sizes = [16, 64], strides = [1, 1]} : vector<16x128xf32> to vector<16x64xf32>
    %26 = vector.extract_strided_slice %15 {offsets = [0, 192], sizes = [16, 64], strides = [1, 1]} : vector<16x384xf32> to vector<16x64xf32>
    %27 = vector.extract_strided_slice %15 {offsets = [0, 256], sizes = [16, 128], strides = [1, 1]} : vector<16x384xf32> to vector<16x128xf32>
    %c0_12 = arith.constant 0 : index
    %c0_13 = arith.constant 0 : index
    %28 = vector.load %arg5[%c0_12, %c0_13] : memref<16x128xf32, #tpu.memory_space<vmem>>, vector<16x128xf32>
    %29 = arith.mulf %27, %28 : vector<16x128xf32>
    %cst_14 = arith.constant dense<0.000000e+00> : vector<32x128xf32>
    %30 = tpu.matmul %24, %29, %cst_14 {dimension_numbers = #tpu.dot_dimension_numbers<[0], [0], [1], [1], [0, 1, 1, 1], [], []>} : vector<16x32xf32>, vector<16x128xf32>, vector<32x128xf32> -> vector<32x128xf32>
    %c0_15 = arith.constant 0 : index
    %c0_16 = arith.constant 0 : index
    %31 = vector.load %arg15[%c0_15, %c0_16] : memref<32x128xf32, #tpu.memory_space<vmem>>, vector<32x128xf32>
    tpu.vector_store %arg15[%c0_15, %c0_16], %30 {strides = array<i32>} : memref<32x128xf32, #tpu.memory_space<vmem>>, vector<32x128xf32>,
    %32 = vector.extract_strided_slice %23 {offsets = [0, 0], sizes = [16, 16], strides = [1, 1]} : vector<16x32xf32> to vector<16x16xf32>
    %33 = vector.extract_strided_slice %24 {offsets = [0, 0], sizes = [16, 16], strides = [1, 1]} : vector<16x32xf32> to vector<16x16xf32>
    %34 = vector.extract_strided_slice %25 {offsets = [0, 0], sizes = [16, 32], strides = [1, 1]} : vector<16x64xf32> to vector<16x32xf32>
    %cst_17 = arith.constant dense<0.000000e+00> : vector<16x16xf32>
    %35 = tpu.matmul %32, %33, %cst_17 {dimension_numbers = #tpu.dot_dimension_numbers<[1], [1], [0], [0], [0, 0, 1, 0], [], []>} : vector<16x16xf32>, vector<16x16xf32>, vector<16x16xf32> -> vector<16x16xf32>
    %c0_18 = arith.constant 0 : index
    %c0_19 = arith.constant 0 : index
    %c0_20 = arith.constant 0 : index
    %36 = vector.load %arg4[%c0_18, %c0_19, %c0_20] : memref<2x16x16xf32, #tpu.memory_space<vmem>>, vector<1x16x16xf32>
    %37 = vector.shape_cast %36 : vector<1x16x16xf32> to vector<16x16xf32>
    %38 = arith.mulf %35, %37 : vector<16x16xf32>
    %cst_21 = arith.constant dense<0.000000e+00> : vector<16xf32>
    %39 = vector.multi_reduction <add>, %38, %cst_21 [1] : vector<16x16xf32> to vector<16xf32>
    %40 = vector.shape_cast %39 : vector<16xf32> to vector<16x1xf32>
    %41 = math.absf %40 : vector<16x1xf32>
    %cst_22 = arith.constant 1.000000e+00 : f32
    %42 = vector.broadcast %cst_22 : f32 to vector<16x1xf32>
    %43 = arith.maximumf %41, %42 : vector<16x1xf32>
    %44 = tpu.reciprocal %43 {approx = true} : vector<16x1xf32> -> vector<16x1xf32>
    %45 = vector.broadcast %44 : vector<16x1xf32> to vector<16x16xf32>
    %46 = arith.mulf %38, %45 : vector<16x16xf32>
    %cst_23 = arith.constant dense<0.000000e+00> : vector<16x32xf32>
    %47 = tpu.matmul %46, %34, %cst_23 {dimension_numbers = #tpu.dot_dimension_numbers<[1], [0], [0], [1], [0, 0, 1, 1], [], []>} : vector<16x16xf32>, vector<16x32xf32>, vector<16x32xf32> -> vector<16x32xf32>
    %48 = arith.mulf %47, %47 : vector<16x32xf32>
    %cst_24 = arith.constant dense<0.000000e+00> : vector<16xf32>
    %49 = vector.multi_reduction <add>, %48, %cst_24 [1] : vector<16x32xf32> to vector<16xf32>
    %50 = vector.shape_cast %49 : vector<16xf32> to vector<16x1xf32>
    %cst_25 = arith.constant 3.200000e+01 : f32
    %51 = vector.broadcast %cst_25 : f32 to vector<16x1xf32>
    %52 = arith.divf %50, %51 : vector<16x1xf32>
    %cst_26 = arith.constant 9.99999997E-7 : f32
    %53 = vector.broadcast %cst_26 : f32 to vector<16x1xf32>
    %54 = arith.addf %52, %53 : vector<16x1xf32>
    %55 = math.rsqrt %54 : vector<16x1xf32>
    %56 = vector.broadcast %55 : vector<16x1xf32> to vector<16x32xf32>
    %57 = arith.mulf %47, %56 : vector<16x32xf32>
    %c0_27 = arith.constant 0 : index
    %c0_28 = arith.constant 0 : index
    %58 = vector.load %arg16[%c0_27, %c0_28] : memref<16x64xf32, #tpu.memory_space<vmem>>, vector<16x32xf32>
    tpu.vector_store %arg16[%c0_27, %c0_28], %57 {strides = array<i32>} : memref<16x64xf32, #tpu.memory_space<vmem>>, vector<16x32xf32>,
    %59 = vector.extract_strided_slice %23 {offsets = [0, 16], sizes = [16, 16], strides = [1, 1]} : vector<16x32xf32> to vector<16x16xf32>
    %60 = vector.extract_strided_slice %24 {offsets = [0, 16], sizes = [16, 16], strides = [1, 1]} : vector<16x32xf32> to vector<16x16xf32>
    %61 = vector.extract_strided_slice %25 {offsets = [0, 32], sizes = [16, 32], strides = [1, 1]} : vector<16x64xf32> to vector<16x32xf32>
    %cst_29 = arith.constant dense<0.000000e+00> : vector<16x16xf32>
    %62 = tpu.matmul %59, %60, %cst_29 {dimension_numbers = #tpu.dot_dimension_numbers<[1], [1], [0], [0], [0, 0, 1, 0], [], []>} : vector<16x16xf32>, vector<16x16xf32>, vector<16x16xf32> -> vector<16x16xf32>
    %c1 = arith.constant 1 : index
    %c0_30 = arith.constant 0 : index
    %c0_31 = arith.constant 0 : index
    %63 = vector.load %arg4[%c1, %c0_30, %c0_31] : memref<2x16x16xf32, #tpu.memory_space<vmem>>, vector<1x16x16xf32>
    %64 = vector.shape_cast %63 : vector<1x16x16xf32> to vector<16x16xf32>
    %65 = arith.mulf %62, %64 : vector<16x16xf32>
    %cst_32 = arith.constant dense<0.000000e+00> : vector<16xf32>
    %66 = vector.multi_reduction <add>, %65, %cst_32 [1] : vector<16x16xf32> to vector<16xf32>
    %67 = vector.shape_cast %66 : vector<16xf32> to vector<16x1xf32>
    %68 = math.absf %67 : vector<16x1xf32>
    %cst_33 = arith.constant 1.000000e+00 : f32
    %69 = vector.broadcast %cst_33 : f32 to vector<16x1xf32>
    %70 = arith.maximumf %68, %69 : vector<16x1xf32>
    %71 = tpu.reciprocal %70 {approx = true} : vector<16x1xf32> -> vector<16x1xf32>
    %72 = vector.broadcast %71 : vector<16x1xf32> to vector<16x16xf32>
    %73 = arith.mulf %65, %72 : vector<16x16xf32>
    %cst_34 = arith.constant dense<0.000000e+00> : vector<16x32xf32>
    %74 = tpu.matmul %73, %61, %cst_34 {dimension_numbers = #tpu.dot_dimension_numbers<[1], [0], [0], [1], [0, 0, 1, 1], [], []>} : vector<16x16xf32>, vector<16x32xf32>, vector<16x32xf32> -> vector<16x32xf32>
    %75 = arith.mulf %74, %74 : vector<16x32xf32>
    %cst_35 = arith.constant dense<0.000000e+00> : vector<16xf32>
    %76 = vector.multi_reduction <add>, %75, %cst_35 [1] : vector<16x32xf32> to vector<16xf32>
    %77 = vector.shape_cast %76 : vector<16xf32> to vector<16x1xf32>
    %cst_36 = arith.constant 3.200000e+01 : f32
    %78 = vector.broadcast %cst_36 : f32 to vector<16x1xf32>
    %79 = arith.divf %77, %78 : vector<16x1xf32>
    %cst_37 = arith.constant 9.99999997E-7 : f32
    %80 = vector.broadcast %cst_37 : f32 to vector<16x1xf32>
    %81 = arith.addf %79, %80 : vector<16x1xf32>
    %82 = math.rsqrt %81 : vector<16x1xf32>
    %83 = vector.broadcast %82 : vector<16x1xf32> to vector<16x32xf32>
    %84 = arith.mulf %74, %83 : vector<16x32xf32>
    %c0_38 = arith.constant 0 : index
    %c32 = arith.constant 32 : index
    %85 = vector.load %arg16[%c0_38, %c32] : memref<16x64xf32, #tpu.memory_space<vmem>>, vector<16x32xf32>
    tpu.vector_store %arg16[%c0_38, %c32], %84 {strides = array<i32>} : memref<16x64xf32, #tpu.memory_space<vmem>>, vector<16x32xf32>,
    %86 = arith.negf %26 : vector<16x64xf32>
    %87 = math.exp %86 : vector<16x64xf32>
    %cst_39 = arith.constant 1.000000e+00 : f32
    %88 = vector.broadcast %cst_39 : f32 to vector<16x64xf32>
    %89 = arith.addf %88, %87 : vector<16x64xf32>
    %90 = arith.divf %88, %89 : vector<16x64xf32>
    %91 = arith.mulf %26, %90 : vector<16x64xf32>
    %c0_40 = arith.constant 0 : index
    %c0_41 = arith.constant 0 : index
    %92 = vector.load %arg16[%c0_40, %c0_41] : memref<16x64xf32, #tpu.memory_space<vmem>>, vector<16x64xf32>
    %93 = arith.mulf %91, %92 : vector<16x64xf32>
    %c0_42 = arith.constant 0 : index
    %c0_43 = arith.constant 0 : index
    %94 = vector.load %arg7[%c0_42, %c0_43] : memref<64x32xf32, #tpu.memory_space<vmem>>, vector<64x32xf32>
    %cst_44 = arith.constant dense<0.000000e+00> : vector<16x32xf32>
    %95 = tpu.matmul %93, %94, %cst_44 {dimension_numbers = #tpu.dot_dimension_numbers<[1], [0], [0], [1], [0, 0, 1, 1], [], []>} : vector<16x64xf32>, vector<64x32xf32>, vector<16x32xf32> -> vector<16x32xf32>
    %c0_45 = arith.constant 0 : index
    %c0_46 = arith.constant 0 : index
    %96 = vector.load %arg1[%c0_45, %c0_46] : memref<16x32xf32, #tpu.memory_space<vmem>>, vector<16x32xf32>
    %c0_47 = arith.constant 0 : index
    %c0_48 = arith.constant 0 : index
    %97 = vector.load %arg10[%c0_47, %c0_48] : memref<32x128xf32, #tpu.memory_space<vmem>>, vector<32x128xf32>
    %cst_49 = arith.constant dense<0.000000e+00> : vector<16x128xf32>
    %98 = tpu.matmul %96, %97, %cst_49 {dimension_numbers = #tpu.dot_dimension_numbers<[1], [0], [0], [1], [0, 0, 1, 1], [], []>} : vector<16x32xf32>, vector<32x128xf32>, vector<16x128xf32> -> vector<16x128xf32>
    %c0_50 = arith.constant 0 : index
    %c0_51 = arith.constant 0 : index
    %99 = vector.load %arg11[%c0_50, %c0_51] : memref<1x128xf32, #tpu.memory_space<vmem>>, vector<1x128xf32>
    %100 = vector.broadcast %99 : vector<1x128xf32> to vector<16x128xf32>
    %101 = arith.addf %98, %100 : vector<16x128xf32>
    %cst_52 = arith.constant 1.000000e+00 : f32
    %102 = vector.broadcast %cst_52 : f32 to vector<16x32xf32>
    %103 = arith.mulf %0, %102 : vector<16x32xf32>
    %104 = arith.addf %103, %95 : vector<16x32xf32>
    %cst_53 = arith.constant dense<0.000000e+00> : vector<16xf32>
    %105 = vector.multi_reduction <add>, %104, %cst_53 [1] : vector<16x32xf32> to vector<16xf32>
    %106 = vector.shape_cast %105 : vector<16xf32> to vector<16x1xf32>
    %cst_54 = arith.constant 3.200000e+01 : f32
    %107 = vector.broadcast %cst_54 : f32 to vector<16x1xf32>
    %108 = arith.divf %106, %107 : vector<16x1xf32>
    %109 = vector.broadcast %108 : vector<16x1xf32> to vector<16x32xf32>
    %110 = arith.subf %104, %109 : vector<16x32xf32>
    %111 = arith.mulf %110, %110 : vector<16x32xf32>
    %cst_55 = arith.constant dense<0.000000e+00> : vector<16xf32>
    %112 = vector.multi_reduction <add>, %111, %cst_55 [1] : vector<16x32xf32> to vector<16xf32>
    %113 = vector.shape_cast %112 : vector<16xf32> to vector<16x1xf32>
    %cst_56 = arith.constant 3.200000e+01 : f32
    %114 = vector.broadcast %cst_56 : f32 to vector<16x1xf32>
    %115 = arith.divf %113, %114 : vector<16x1xf32>
    %cst_57 = arith.constant 9.99999974E-6 : f32
    %116 = vector.broadcast %cst_57 : f32 to vector<16x1xf32>
    %117 = arith.addf %115, %116 : vector<16x1xf32>
    %118 = math.rsqrt %117 : vector<16x1xf32>
    %119 = vector.broadcast %118 : vector<16x1xf32> to vector<16x32xf32>
    %120 = arith.mulf %110, %119 : vector<16x32xf32>
    %121 = vector.extract_strided_slice %101 {offsets = [0, 0], sizes = [16, 32], strides = [1, 1]} : vector<16x128xf32> to vector<16x32xf32>
    %122 = arith.mulf %121, %120 : vector<16x32xf32>
    %123 = vector.extract_strided_slice %101 {offsets = [0, 32], sizes = [16, 32], strides = [1, 1]} : vector<16x128xf32> to vector<16x32xf32>
    %124 = arith.addf %122, %123 : vector<16x32xf32>
    %c0_58 = arith.constant 0 : index
    %c0_59 = arith.constant 0 : index
    %125 = vector.load %arg9[%c0_58, %c0_59] : memref<1x32xf32, #tpu.memory_space<vmem>>, vector<1x32xf32>
    %126 = arith.mulf %124, %124 : vector<16x32xf32>
    %cst_60 = arith.constant dense<0.000000e+00> : vector<16xf32>
    %127 = vector.multi_reduction <add>, %126, %cst_60 [1] : vector<16x32xf32> to vector<16xf32>
    %128 = vector.shape_cast %127 : vector<16xf32> to vector<16x1xf32>
    %cst_61 = arith.constant 3.200000e+01 : f32
    %129 = vector.broadcast %cst_61 : f32 to vector<16x1xf32>
    %130 = arith.divf %128, %129 : vector<16x1xf32>
    %cst_62 = arith.constant 9.99999997E-7 : f32
    %131 = vector.broadcast %cst_62 : f32 to vector<16x1xf32>
    %132 = arith.addf %130, %131 : vector<16x1xf32>
    %133 = math.rsqrt %132 : vector<16x1xf32>
    %134 = vector.broadcast %133 : vector<16x1xf32> to vector<16x32xf32>
    %135 = arith.mulf %124, %134 : vector<16x32xf32>
    %136 = vector.broadcast %125 : vector<1x32xf32> to vector<16x32xf32>
    %137 = arith.mulf %135, %136 : vector<16x32xf32>
    %c0_63 = arith.constant 0 : index
    %c0_64 = arith.constant 0 : index
    %138 = vector.load %arg12[%c0_63, %c0_64] : memref<32x128xf32, #tpu.memory_space<vmem>>, vector<32x128xf32>
    %cst_65 = arith.constant dense<0.000000e+00> : vector<16x128xf32>
    %139 = tpu.matmul %137, %138, %cst_65 {dimension_numbers = #tpu.dot_dimension_numbers<[1], [0], [0], [1], [0, 0, 1, 1], [], []>} : vector<16x32xf32>, vector<32x128xf32>, vector<16x128xf32> -> vector<16x128xf32>
    %140 = vector.extract_strided_slice %139 {offsets = [0, 64], sizes = [16, 64], strides = [1, 1]} : vector<16x128xf32> to vector<16x64xf32>
    %141 = arith.negf %140 : vector<16x64xf32>
    %142 = math.exp %141 : vector<16x64xf32>
    %cst_66 = arith.constant 1.000000e+00 : f32
    %143 = vector.broadcast %cst_66 : f32 to vector<16x64xf32>
    %144 = arith.addf %143, %142 : vector<16x64xf32>
    %145 = arith.divf %143, %144 : vector<16x64xf32>
    %146 = arith.mulf %140, %145 : vector<16x64xf32>
    %147 = vector.extract_strided_slice %139 {offsets = [0, 0], sizes = [16, 64], strides = [1, 1]} : vector<16x128xf32> to vector<16x64xf32>
    %148 = arith.mulf %146, %147 : vector<16x64xf32>
    %c0_67 = arith.constant 0 : index
    %c0_68 = arith.constant 0 : index
    %149 = vector.load %arg13[%c0_67, %c0_68] : memref<64x32xf32, #tpu.memory_space<vmem>>, vector<64x32xf32>
    %cst_69 = arith.constant dense<0.000000e+00> : vector<16x32xf32>
    %150 = tpu.matmul %148, %149, %cst_69 {dimension_numbers = #tpu.dot_dimension_numbers<[1], [0], [0], [1], [0, 0, 1, 1], [], []>} : vector<16x64xf32>, vector<64x32xf32>, vector<16x32xf32> -> vector<16x32xf32>
    %cst_70 = arith.constant 1.000000e+00 : f32
    %151 = vector.broadcast %cst_70 : f32 to vector<16x32xf32>
    %152 = arith.mulf %124, %151 : vector<16x32xf32>
    %153 = arith.addf %152, %150 : vector<16x32xf32>
    %cst_71 = arith.constant dense<0.000000e+00> : vector<16xf32>
    %154 = vector.multi_reduction <add>, %153, %cst_71 [1] : vector<16x32xf32> to vector<16xf32>
    %155 = vector.shape_cast %154 : vector<16xf32> to vector<16x1xf32>
    %cst_72 = arith.constant 3.200000e+01 : f32
    %156 = vector.broadcast %cst_72 : f32 to vector<16x1xf32>
    %157 = arith.divf %155, %156 : vector<16x1xf32>
    %158 = vector.broadcast %157 : vector<16x1xf32> to vector<16x32xf32>
    %159 = arith.subf %153, %158 : vector<16x32xf32>
    %160 = arith.mulf %159, %159 : vector<16x32xf32>
    %cst_73 = arith.constant dense<0.000000e+00> : vector<16xf32>
    %161 = vector.multi_reduction <add>, %160, %cst_73 [1] : vector<16x32xf32> to vector<16xf32>
    %162 = vector.shape_cast %161 : vector<16xf32> to vector<16x1xf32>
    %cst_74 = arith.constant 3.200000e+01 : f32
    %163 = vector.broadcast %cst_74 : f32 to vector<16x1xf32>
    %164 = arith.divf %162, %163 : vector<16x1xf32>
    %cst_75 = arith.constant 9.99999974E-6 : f32
    %165 = vector.broadcast %cst_75 : f32 to vector<16x1xf32>
    %166 = arith.addf %164, %165 : vector<16x1xf32>
    %167 = math.rsqrt %166 : vector<16x1xf32>
    %168 = vector.broadcast %167 : vector<16x1xf32> to vector<16x32xf32>
    %169 = arith.mulf %159, %168 : vector<16x32xf32>
    %170 = vector.extract_strided_slice %101 {offsets = [0, 64], sizes = [16, 32], strides = [1, 1]} : vector<16x128xf32> to vector<16x32xf32>
    %171 = arith.mulf %170, %169 : vector<16x32xf32>
    %172 = vector.extract_strided_slice %101 {offsets = [0, 96], sizes = [16, 32], strides = [1, 1]} : vector<16x128xf32> to vector<16x32xf32>
    %173 = arith.addf %171, %172 : vector<16x32xf32>
    %c0_76 = arith.constant 0 : index
    %c0_77 = arith.constant 0 : index
    %174 = vector.load %arg14[%c0_76, %c0_77] : memref<16x32xf32, #tpu.memory_space<vmem>>, vector<16x32xf32>
    tpu.vector_store %arg14[%c0_76, %c0_77], %173 {strides = array<i32>} : memref<16x32xf32, #tpu.memory_space<vmem>>, vector<16x32xf32>,
    return
  }
}

</mosaic_0001>

<llo_original>
// kernel: retnet_decoder_layer.1
$region0: #{retnet_decoder_layer.1}
  #allocation0 [shape = 'u32[]', space=smem, size = 0x4, offset = 0x4, fixed_abs, tag = 'smem constant byte address 0x4 - core index']
  #allocation1 [shape = 'u32[144,128]{1,0:T(1,128)}', space=vmem, size = 0x12000, scoped, tag = 'internal scratch']
  #allocation2 [shape = 'f32[16,64]{1,0:T(8,128)}', space=vmem, size = 0x2000, scoped, tag = 'scratch operand']
  %s0 = inlined_call_operand.vmem [shape: f32[16,32], index: 0, kind: input, shape index: {}]
  %s1 = inlined_call_operand.vmem [shape: f32[16,32], index: 1, kind: input, shape index: {}]
  %s2 = inlined_call_operand.hbm [shape: f32[16,128], index: 2, kind: input, shape index: {}]
  %s3 = inlined_call_operand.hbm [shape: f32[16,128], index: 3, kind: input, shape index: {}]
  %s4 = inlined_call_operand.vmem [shape: f32[2,16,16], index: 4, kind: input, shape index: {}]
  %s5 = inlined_call_operand.hbm [shape: f32[16,128], index: 5, kind: input, shape index: {}]
  %s6 = inlined_call_operand.vmem [shape: f32[32,384], index: 6, kind: input, shape index: {}]
  %s7 = inlined_call_operand.vmem [shape: f32[64,32], index: 7, kind: input, shape index: {}]
  %s8 = inlined_call_operand.vmem [shape: f32[1,32], index: 8, kind: input, shape index: {}]
  %s9 = inlined_call_operand.vmem [shape: f32[1,32], index: 9, kind: input, shape index: {}]
  %s10 = inlined_call_operand.vmem [shape: f32[32,128], index: 10, kind: input, shape index: {}]
  %s11 = inlined_call_operand.vmem [shape: f32[1,128], index: 11, kind: input, shape index: {}]
  %s12 = inlined_call_operand.hbm [shape: f32[32,128], index: 12, kind: input, shape index: {}]
  %s13 = inlined_call_operand.vmem [shape: f32[64,32], index: 13, kind: input, shape index: {}]
  %s14 = inlined_call_operand.hbm [shape: f32[16,32], index: 14, kind: output, shape index: {0}]
  %s15 = inlined_call_operand.vmem [shape: f32[32,128], index: 15, kind: output, shape index: {1}]
  %16 = xla_tuple %s14, %s15
  %s17 = sld [smem:[#allocation0]]
  $region90: #{retnet_decoder_layer.1} parent=0
    _
  %s19 = ssub.s32 1, %s17
  %s20 = scalar_select 0, %s19, %s17
  $region1: #{retnet_decoder_layer.1} parent=0
    #allocation3 [shape = 'u8[8192]{0}', space=vmem, size = 0x2000, scoped, tag = 'input window, operand 2, single buffered']
    #allocation4 [shape = 's32[1]{0}', space=sflag, size = 0x4, scoped, tag = 'scoped memory for retnet_decoder_layer.1']
    #allocation5 [shape = 's32[1]{0}', space=sflag, size = 0x4, scoped, tag = 'scoped memory for retnet_decoder_layer.1']
    #allocation6 [shape = 'u8[8192]{0}', space=vmem, size = 0x2000, scoped, tag = 'input window, operand 3, single buffered']
    #allocation7 [shape = 's32[1]{0}', space=sflag, size = 0x4, scoped, tag = 'scoped memory for retnet_decoder_layer.1']
    #allocation8 [shape = 'u8[8192]{0}', space=vmem, size = 0x2000, scoped, tag = 'input window, operand 5, single buffered']
    #allocation9 [shape = 'u8[16384]{0}', space=vmem, size = 0x4000, scoped, tag = 'input window, operand 12, single buffered']
    #allocation10 [shape = 's32[1]{0}', space=sflag, size = 0x4, scoped, tag = 'scoped memory for retnet_decoder_layer.1']
    #allocation11 [shape = 'u8[8192]{0}', space=vmem, size = 0x2000, scoped, tag = 'output window, operand 0, single buffered']
    %21 = vsyncpa [#allocation4], 0
    %22 = vsyncpa [#allocation7], 0
    %23 = vsyncpa [#allocation10], 0
    %24 = vsyncpa [#allocation5], 0
    // Predicated region
    $region2: #{retnet_decoder_layer.1} parent=1 // pred_check
      _
    $region3: #{retnet_decoder_layer.1} parent=1 // pred_check_branch
      %26 = sbr.rel (0) target = $region5
    $region4: #{retnet_decoder_layer.1} parent=1 // pred_region
      _
    $region5: #{retnet_decoder_layer.1} parent=1 // pred_fallthru
      _
    // Predicated region
    $region6: #{retnet_decoder_layer.1} parent=1 // pred_check
      _
    $region7: #{retnet_decoder_layer.1} parent=1 // pred_check_branch
      %28 = sbr.rel (0) target = $region9
    $region8: #{retnet_decoder_layer.1} parent=1 // pred_region
      _
    $region9: #{retnet_decoder_layer.1} parent=1 // pred_fallthru
      _
    // Predicated region
    $region10: #{retnet_decoder_layer.1} parent=1 // pred_check
      _
    $region11: #{retnet_decoder_layer.1} parent=1 // pred_check_branch
      %30 = sbr.rel (0) target = $region13
    $region12: #{retnet_decoder_layer.1} parent=1 // pred_region
      %s32 = ssub.s32 256, 256
      %33 = vsyncadd [#allocation4], %s32
      %s34 = sshll.u32 [#allocation3], 4
      %s35 = int_to_ptr.vmem [resolvable:$true] %s34
      %40 = dma.hbm_to_vmem [thread:$0]  %s2, 256, %s35, [#allocation4], 128, 128, 8
    $region13: #{retnet_decoder_layer.1} parent=1 // pred_fallthru
      _
    // Predicated region
    $region14: #{retnet_decoder_layer.1} parent=1 // pred_check
      _
    $region15: #{retnet_decoder_layer.1} parent=1 // pred_check_branch
      %42 = sbr.rel (0) target = $region17
    $region16: #{retnet_decoder_layer.1} parent=1 // pred_region
      %s44 = ssub.s32 256, 256
      %45 = vsyncadd [#allocation7], %s44
      %s46 = sshll.u32 [#allocation6], 4
      %s47 = int_to_ptr.vmem [resolvable:$true] %s46
      %52 = dma.hbm_to_vmem [thread:$0]  %s3, 256, %s47, [#allocation7], 128, 128, 8
    $region17: #{retnet_decoder_layer.1} parent=1 // pred_fallthru
      _
    // Predicated region
    $region18: #{retnet_decoder_layer.1} parent=1 // pred_check
      _
    $region19: #{retnet_decoder_layer.1} parent=1 // pred_check_branch
      %54 = sbr.rel (0) target = $region21
    $region20: #{retnet_decoder_layer.1} parent=1 // pred_region
      _
    $region21: #{retnet_decoder_layer.1} parent=1 // pred_fallthru
      _
    // Predicated region
    $region22: #{retnet_decoder_layer.1} parent=1 // pred_check
      _
    $region23: #{retnet_decoder_layer.1} parent=1 // pred_check_branch
      %56 = sbr.rel (0) target = $region25
    $region24: #{retnet_decoder_layer.1} parent=1 // pred_region
      %s58 = ssub.s32 256, 256
      %59 = vsyncadd [#allocation7], %s58
      %s60 = sshll.u32 [#allocation8], 4
      %s61 = int_to_ptr.vmem [resolvable:$true] %s60
      %66 = dma.hbm_to_vmem [thread:$0]  %s5, 256, %s61, [#allocation7], 128, 128, 8
    $region25: #{retnet_decoder_layer.1} parent=1 // pred_fallthru
      _
    // Predicated region
    $region26: #{retnet_decoder_layer.1} parent=1 // pred_check
      _
    $region27: #{retnet_decoder_layer.1} parent=1 // pred_check_branch
      %68 = sbr.rel (0) target = $region29
    $region28: #{retnet_decoder_layer.1} parent=1 // pred_region
      _
    $region29: #{retnet_decoder_layer.1} parent=1 // pred_fallthru
      _
    // Predicated region
    $region30: #{retnet_decoder_layer.1} parent=1 // pred_check
      _
    $region31: #{retnet_decoder_layer.1} parent=1 // pred_check_branch
      %70 = sbr.rel (0) target = $region33
    $region32: #{retnet_decoder_layer.1} parent=1 // pred_region
      _
    $region33: #{retnet_decoder_layer.1} parent=1 // pred_fallthru
      _
    // Predicated region
    $region34: #{retnet_decoder_layer.1} parent=1 // pred_check
      _
    $region35: #{retnet_decoder_layer.1} parent=1 // pred_check_branch
      %72 = sbr.rel (0) target = $region37
    $region36: #{retnet_decoder_layer.1} parent=1 // pred_region
      _
    $region37: #{retnet_decoder_layer.1} parent=1 // pred_fallthru
      _
    // Predicated region
    $region38: #{retnet_decoder_layer.1} parent=1 // pred_check
      _
    $region39: #{retnet_decoder_layer.1} parent=1 // pred_check_branch
      %74 = sbr.rel (0) target = $region41
    $region40: #{retnet_decoder_layer.1} parent=1 // pred_region
      _
    $region41: #{retnet_decoder_layer.1} parent=1 // pred_fallthru
      _
    // Predicated region
    $region42: #{retnet_decoder_layer.1} parent=1 // pred_check
      _
    $region43: #{retnet_decoder_layer.1} parent=1 // pred_check_branch
      %76 = sbr.rel (0) target = $region45
    $region44: #{retnet_decoder_layer.1} parent=1 // pred_region
      _
    $region45: #{retnet_decoder_layer.1} parent=1 // pred_fallthru
      _
    // Predicated region
    $region46: #{retnet_decoder_layer.1} parent=1 // pred_check
      _
    $region47: #{retnet_decoder_layer.1} parent=1 // pred_check_branch
      %78 = sbr.rel (0) target = $region49
    $region48: #{retnet_decoder_layer.1} parent=1 // pred_region
      _
    $region49: #{retnet_decoder_layer.1} parent=1 // pred_fallthru
      _
    // Predicated region
    $region50: #{retnet_decoder_layer.1} parent=1 // pred_check
      _
    $region51: #{retnet_decoder_layer.1} parent=1 // pred_check_branch
      %80 = sbr.rel (0) target = $region53
    $region52: #{retnet_decoder_layer.1} parent=1 // pred_region
      %s82 = ssub.s32 512, 512
      %83 = vsyncadd [#allocation10], %s82
      %s84 = sshll.u32 [#allocation9], 4
      %s85 = int_to_ptr.vmem [resolvable:$true] %s84
      %90 = dma.hbm_to_vmem [thread:$0]  %s12, 512, %s85, [#allocation10], 128, 128, 8
    $region53: #{retnet_decoder_layer.1} parent=1 // pred_fallthru
      _
    // Predicated region
    $region54: #{retnet_decoder_layer.1} parent=1 // pred_check
      _
    $region55: #{retnet_decoder_layer.1} parent=1 // pred_check_branch
      %92 = sbr.rel (0) target = $region57
    $region56: #{retnet_decoder_layer.1} parent=1 // pred_region
      _
    $region57: #{retnet_decoder_layer.1} parent=1 // pred_fallthru
      _
    // Predicated region
    $region58: #{retnet_decoder_layer.1} parent=1 // pred_check
      _
    $region59: #{retnet_decoder_layer.1} parent=1 // pred_check_branch
      %94 = sbr.rel (0) target = $region61
    $region60: #{retnet_decoder_layer.1} parent=1 // pred_region
      %95 = dma.done [#allocation4], 256
    $region61: #{retnet_decoder_layer.1} parent=1 // pred_fallthru
      _
    // Predicated region
    $region62: #{retnet_decoder_layer.1} parent=1 // pred_check
      _
    $region63: #{retnet_decoder_layer.1} parent=1 // pred_check_branch
      %97 = sbr.rel (0) target = $region65
    $region64: #{retnet_decoder_layer.1} parent=1 // pred_region
      %98 = dma.done [#allocation7], 256
    $region65: #{retnet_decoder_layer.1} parent=1 // pred_fallthru
      _
    // Predicated region
    $region66: #{retnet_decoder_layer.1} parent=1 // pred_check
      _
    $region67: #{retnet_decoder_layer.1} parent=1 // pred_check_branch
      %100 = sbr.rel (0) target = $region69
    $region68: #{retnet_decoder_layer.1} parent=1 // pred_region
      %101 = dma.done [#allocation7], 256
    $region69: #{retnet_decoder_layer.1} parent=1 // pred_fallthru
      _
    // Predicated region
    $region70: #{retnet_decoder_layer.1} parent=1 // pred_check
      _
    $region71: #{retnet_decoder_layer.1} parent=1 // pred_check_branch
      %103 = sbr.rel (0) target = $region73
    $region72: #{retnet_decoder_layer.1} parent=1 // pred_region
      %104 = dma.done [#allocation10], 512
    $region73: #{retnet_decoder_layer.1} parent=1 // pred_fallthru
      _
    %v105 = vld [vmem:[%s0] sm:$0xff]
    %v106 = vld [vmem:[%s0 + $0x8] sm:$0xff]
    %v107 = vld [vmem:[%s8] sm:$0x1]
    %v108 = vmul.f32 %v105, %v105
    %v109 = vmul.f32 %v106, %v106
    %vm110 = vcmask 261120
    %v111 = vsel %vm110, %v108, 0.0
    %112 = vadd.xlane.f32.xlu0 %v111
    %v113 = vpop.xlane.xlu0 %112
    %v114 = vsel %vm110, %v109, 0.0
    %115 = vadd.xlane.f32.xlu0 %v114
    %v116 = vpop.xlane.xlu0 %115
    %v117 = vrcp.pop 32.0
    %v118 = vmul.f32 %v113, %v117
    %v119 = vmul.f32 %v116, %v117
    %v120 = vadd.f32 %v118, 1e-06
    %v121 = vadd.f32 %v119, 1e-06
    %v122 = vrsqrt.pop %v120
    %v123 = vrsqrt.pop %v121
    %v124 = vmul.f32 %v105, %v122
    %v125 = vmul.f32 %v106, %v123
    %v127 = vlaneseq
    %v128 = vshrl.u32 %v127, 7
    %v129 = vsub.s32 0, %v128
    %v130 = vrot.slane %v107, %v129
    %v132 = vmul.f32 %v124, %v130
    %v133 = vmul.f32 %v125, %v130
    %v134 = vld [vmem:[%s6] sm:$0xff]
    %v135 = vld [vmem:[%s6 + $0x8] sm:$0xff]
    %v136 = vld [vmem:[%s6 + $0x10] sm:$0xff]
    %v137 = vld [vmem:[%s6 + $0x18] sm:$0xff]
    %v138 = vld [vmem:[%s6 + $0x20] sm:$0xff]
    %v139 = vld [vmem:[%s6 + $0x28] sm:$0xff]
    %v140 = vld [vmem:[%s6 + $0x30] sm:$0xff]
    %v141 = vld [vmem:[%s6 + $0x38] sm:$0xff]
    %v142 = vld [vmem:[%s6 + $0x40] sm:$0xff]
    %v143 = vld [vmem:[%s6 + $0x48] sm:$0xff]
    %v144 = vld [vmem:[%s6 + $0x50] sm:$0xff]
    %v145 = vld [vmem:[%s6 + $0x58] sm:$0xff]
    %v147 = vsel %vm110, %v132, 0
    %v150 = vsel %vm110, %v133, 0
    %152 = vmatprep.subr.mxu0 %v135
    %153 = vmatpush1.msra.mxu0 %v134
    %154 = vmatprep.subr.mxu0 %v138
    %155 = vmatpush1.msra.mxu0 %v137
    %156 = vmatprep.subr.mxu0 %v141
    %157 = vmatpush1.msra.mxu0 %v140
    %158 = vmatprep.subr.mxu0 %v144
    %159 = vmatpush1.msra.mxu0 %v143
    %160 = vmatprep.subr.mxu0 0.0
    %161 = vmatpush1.msra.mxu0 0.0
    %162 = vmatprep.subr.mxu0 0.0
    %163 = vmatpush1.msra.mxu0 0.0
    %164 = vmatprep.subr.mxu0 0.0
    %165 = vmatpush1.msra.mxu0 0.0
    %166 = vmatprep.subr.mxu0 0.0
    %167 = vmatpush1.msra.mxu0 0.0
    %168 = vmatprep.subr.mxu0 0.0
    %169 = vmatpush1.msra.mxu0 0.0
    %170 = vmatprep.subr.mxu0 0.0
    %171 = vmatpush1.msra.mxu0 0.0
    %172 = vmatprep.subr.mxu0 0.0
    %173 = vmatpush1.msra.mxu0 0.0
    %174 = vmatprep.subr.mxu0 0.0
    %175 = vmatpush1.msra.mxu0 0.0
    %176 = vmatprep.subr.mxu0 0.0
    %177 = vmatpush1.msra.mxu0 0.0
    %178 = vmatprep.subr.mxu0 0.0
    %179 = vmatpush1.msra.mxu0 0.0
    %180 = vmatprep.subr.mxu0 0.0
    %181 = vmatpush1.msra.mxu0 0.0
    %182 = vmatprep.subr.mxu0 0.0
    %183 = vmatpush1.msra.mxu0 0.0
    %184 = vmatprep.subr.mxu0 0.0
    %185 = vmatpush1.msra.mxu0 0.0
    %186 = vmatprep.subr.mxu0 0.0
    %187 = vmatpush1.msra.mxu0 0.0
    %188 = vmatprep.subr.mxu0 0.0
    %189 = vmatpush1.msra.mxu0 0.0
    %190 = vmatprep.subr.mxu0 0.0
    %191 = vmatpush1.msra.mxu0 0.0
    %192 = vmatprep.subr.mxu0 0.0
    %193 = vmatpush1.msra.mxu0 0.0
    %194 = vmatprep.subr.mxu0 0.0
    %195 = vmatpush1.msra.mxu0 0.0
    %196 = vmatprep.subr.mxu0 0.0
    %197 = vmatpush1.msra.mxu0 0.0
    %198 = vmatprep.subr.mxu0 0.0
    %199 = vmatpush1.msra.mxu0 0.0
    %200 = vmatprep.subr.mxu0 0.0
    %201 = vmatpush1.msra.mxu0 0.0
    %202 = vmatprep.subr.mxu0 0.0
    %203 = vmatpush1.msra.mxu0 0.0
    %204 = vmatprep.subr.mxu0 0.0
    %205 = vmatpush1.msra.mxu0 0.0
    %206 = vmatprep.subr.mxu0 0.0
    %207 = vmatpush1.msra.mxu0 0.0
    %208 = vmatprep.subr.mxu0 0.0
    %209 = vmatpush1.msra.mxu0 0.0
    %210 = vmatprep.subr.mxu0 0.0
    %211 = vmatpush1.msra.mxu0 0.0
    %212 = vmatprep.subr.mxu0 0.0
    %213 = vmatpush1.msra.mxu0 0.0
    %214 = vmatprep.subr.mxu0 0.0
    %215 = vmatpush1.msra.mxu0 0.0
    %216 = vmatprep.mubr.f32.mxu0 0.0
    %217 = vmatmul.mubr.f32.gmra.mrb[0].mxu0 %v147
    %v218 = vpop.f32.mrb[0].mxu0
    %v219 = vadd.f32 0.0, %v218
    %v220 = vpop.f32.mrb[0].mxu0
    %v221 = vadd.f32 0.0, %v220
    %222 = vmatprep.mubr.f32.mxu0 0.0
    %223 = vmatmul.mubr.f32.gmra.mrb[0].mxu0 %v150
    %v224 = vpop.f32.mrb[0].mxu0
    %v225 = vadd.f32 0.0, %v224
    %v226 = vpop.f32.mrb[0].mxu0
    %v227 = vadd.f32 0.0, %v226
    %228 = vdwg.mxu0
    %229 = vmatprep.subr.mxu0 0.0
    %230 = vmatpush1.msra.mxu0 %v136
    %231 = vmatprep.subr.mxu0 0.0
    %232 = vmatpush1.msra.mxu0 %v139
    %233 = vmatprep.subr.mxu0 0.0
    %234 = vmatpush1.msra.mxu0 %v142
    %235 = vmatprep.subr.mxu0 0.0
    %236 = vmatpush1.msra.mxu0 %v145
    %237 = vmatprep.subr.mxu0 0.0
    %238 = vmatpush1.msra.mxu0 0.0
    %239 = vmatprep.subr.mxu0 0.0
    %240 = vmatpush1.msra.mxu0 0.0
    %241 = vmatprep.subr.mxu0 0.0
    %242 = vmatpush1.msra.mxu0 0.0
    %243 = vmatprep.subr.mxu0 0.0
    %244 = vmatpush1.msra.mxu0 0.0
    %245 = vmatprep.subr.mxu0 0.0
    %246 = vmatpush1.msra.mxu0 0.0
    %247 = vmatprep.subr.mxu0 0.0
    %248 = vmatpush1.msra.mxu0 0.0
    %249 = vmatprep.subr.mxu0 0.0
    %250 = vmatpush1.msra.mxu0 0.0
    %251 = vmatprep.subr.mxu0 0.0
    %252 = vmatpush1.msra.mxu0 0.0
    %253 = vmatprep.subr.mxu0 0.0
    %254 = vmatpush1.msra.mxu0 0.0
    %255 = vmatprep.subr.mxu0 0.0
    %256 = vmatpush1.msra.mxu0 0.0
    %257 = vmatprep.subr.mxu0 0.0
    %258 = vmatpush1.msra.mxu0 0.0
    %259 = vmatprep.subr.mxu0 0.0
    %260 = vmatpush1.msra.mxu0 0.0
    %261 = vmatprep.subr.mxu0 0.0
    %262 = vmatpush1.msra.mxu0 0.0
    %263 = vmatprep.subr.mxu0 0.0
    %264 = vmatpush1.msra.mxu0 0.0
    %265 = vmatprep.subr.mxu0 0.0
    %266 = vmatpush1.msra.mxu0 0.0
    %267 = vmatprep.subr.mxu0 0.0
    %268 = vmatpush1.msra.mxu0 0.0
    %269 = vmatprep.subr.mxu0 0.0
    %270 = vmatpush1.msra.mxu0 0.0
    %271 = vmatprep.subr.mxu0 0.0
    %272 = vmatpush1.msra.mxu0 0.0
    %273 = vmatprep.subr.mxu0 0.0
    %274 = vmatpush1.msra.mxu0 0.0
    %275 = vmatprep.subr.mxu0 0.0
    %276 = vmatpush1.msra.mxu0 0.0
    %277 = vmatprep.subr.mxu0 0.0
    %278 = vmatpush1.msra.mxu0 0.0
    %279 = vmatprep.subr.mxu0 0.0
    %280 = vmatpush1.msra.mxu0 0.0
    %281 = vmatprep.subr.mxu0 0.0
    %282 = vmatpush1.msra.mxu0 0.0
    %283 = vmatprep.subr.mxu0 0.0
    %284 = vmatpush1.msra.mxu0 0.0
    %285 = vmatprep.subr.mxu0 0.0
    %286 = vmatpush1.msra.mxu0 0.0
    %287 = vmatprep.subr.mxu0 0.0
    %288 = vmatpush1.msra.mxu0 0.0
    %289 = vmatprep.subr.mxu0 0.0
    %290 = vmatpush1.msra.mxu0 0.0
    %291 = vmatprep.subr.mxu0 0.0
    %292 = vmatpush1.msra.mxu0 0.0
    %293 = vmatprep.mubr.f32.mxu0 0.0
    %294 = vmatmul.mubr.f32.gmra.mrb[0].mxu0 %v147
    %v295 = vpop.f32.mrb[0].mxu0
    %v296 = vadd.f32 0.0, %v295
    %v297 = vpop.f32.mrb[0].mxu0
    %298 = vmatprep.mubr.f32.mxu0 0.0
    %299 = vmatmul.mubr.f32.gmra.mrb[0].mxu0 %v150
    %v300 = vpop.f32.mrb[0].mxu0
    %v301 = vadd.f32 0.0, %v300
    %v302 = vpop.f32.mrb[0].mxu0
    %303 = vdwg.mxu0
    %v304 = vld [vmem:[#allocation3] sm:$0xff]
    %v305 = vld [vmem:[#allocation3 + $0x8] sm:$0xff]
    %v306 = vmul.f32 %v219, %v304
    %v307 = vmul.f32 %v225, %v305
    %v308 = vld [vmem:[#allocation6] sm:$0xff]
    %v309 = vld [vmem:[#allocation6 + $0x8] sm:$0xff]
    %v310 = vmul.f32 %v221, %v308
    %v311 = vmul.f32 %v227, %v309
    %v312 = vadd.f32 %v306, %v310
    %v313 = vadd.f32 %v307, %v311
    %v314 = vld [vmem:[#allocation8] sm:$0xff]
    %v315 = vld [vmem:[#allocation8 + $0x8] sm:$0xff]
    %v316 = vmul.f32 %v296, %v314
    %v317 = vmul.f32 %v301, %v315
    %320 = vrot.lane.b32.xlu0 %v312, 96
    %v321 = vpop.permute.xlu0 %320
    %322 = vrot.lane.b32.xlu0 %v313, 96
    %v323 = vpop.permute.xlu0 %322
    %326 = vxpose.xlu0.b32.start [1/16] %v321, 128
    %327 = vxpose.xlu0.b32.cont [2/16] %v323, 128
    %328 = vxpose.xlu0.b32.cont [3/16] 0.0, 128
    %329 = vxpose.xlu0.b32.cont [4/16] 0.0, 128
    %330 = vxpose.xlu0.b32.cont [5/16] 0.0, 128
    %331 = vxpose.xlu0.b32.cont [6/16] 0.0, 128
    %332 = vxpose.xlu0.b32.cont [7/16] 0.0, 128
    %333 = vxpose.xlu0.b32.cont [8/16] 0.0, 128
    %334 = vxpose.xlu0.b32.cont [9/16] 0.0, 128
    %335 = vxpose.xlu0.b32.cont [10/16] 0.0, 128
    %336 = vxpose.xlu0.b32.cont [11/16] 0.0, 128
    %337 = vxpose.xlu0.b32.cont [12/16] 0.0, 128
    %338 = vxpose.xlu0.b32.cont [13/16] 0.0, 128
    %339 = vxpose.xlu0.b32.cont [14/16] 0.0, 128
    %340 = vxpose.xlu0.b32.cont [15/16] 0.0, 128
    %341 = vxpose.xlu0.b32.end [16/16] 0.0, 128
    %v342 = vpop.trf.xlu0
    %v343 = vpop.trf.xlu0
    %v344 = vpop.trf.xlu0
    %v345 = vpop.trf.xlu0
    %v346 = vpop.trf.xlu0
    %v347 = vpop.trf.xlu0
    %v348 = vpop.trf.xlu0
    %v349 = vpop.trf.xlu0
    %v350 = vpop.trf.xlu0
    %v351 = vpop.trf.xlu0
    %v352 = vpop.trf.xlu0
    %v353 = vpop.trf.xlu0
    %v354 = vpop.trf.xlu0
    %v355 = vpop.trf.xlu0
    %v356 = vpop.trf.xlu0
    %v357 = vpop.trf.xlu0
    %vm358 = vcmask 130048
    %v360 = vsel %vm358, %v342, 0
    %v363 = vsel %vm358, %v343, 0
    %v366 = vsel %vm358, %v344, 0
    %v369 = vsel %vm358, %v345, 0
    %371 = vmatprep.subr.mxu0 0.0
    %372 = vmatpush1.msra.mxu0 %v316
    %373 = vmatprep.subr.mxu0 0.0
    %374 = vmatpush1.msra.mxu0 %v317
    %375 = vmatprep.subr.mxu0 0.0
    %376 = vmatpush1.msra.mxu0 0.0
    %377 = vmatprep.subr.mxu0 0.0
    %378 = vmatpush1.msra.mxu0 0.0
    %379 = vmatprep.subr.mxu0 0.0
    %380 = vmatpush1.msra.mxu0 0.0
    %381 = vmatprep.subr.mxu0 0.0
    %382 = vmatpush1.msra.mxu0 0.0
    %383 = vmatprep.subr.mxu0 0.0
    %384 = vmatpush1.msra.mxu0 0.0
    %385 = vmatprep.subr.mxu0 0.0
    %386 = vmatpush1.msra.mxu0 0.0
    %387 = vmatprep.subr.mxu0 0.0
    %388 = vmatpush1.msra.mxu0 0.0
    %389 = vmatprep.subr.mxu0 0.0
    %390 = vmatpush1.msra.mxu0 0.0
    %391 = vmatprep.subr.mxu0 0.0
    %392 = vmatpush1.msra.mxu0 0.0
    %393 = vmatprep.subr.mxu0 0.0
    %394 = vmatpush1.msra.mxu0 0.0
    %395 = vmatprep.subr.mxu0 0.0
    %396 = vmatpush1.msra.mxu0 0.0
    %397 = vmatprep.subr.mxu0 0.0
    %398 = vmatpush1.msra.mxu0 0.0
    %399 = vmatprep.subr.mxu0 0.0
    %400 = vmatpush1.msra.mxu0 0.0
    %401 = vmatprep.subr.mxu0 0.0
    %402 = vmatpush1.msra.mxu0 0.0
    %403 = vmatprep.subr.mxu0 0.0
    %404 = vmatpush1.msra.mxu0 0.0
    %405 = vmatprep.subr.mxu0 0.0
    %406 = vmatpush1.msra.mxu0 0.0
    %407 = vmatprep.subr.mxu0 0.0
    %408 = vmatpush1.msra.mxu0 0.0
    %409 = vmatprep.subr.mxu0 0.0
    %410 = vmatpush1.msra.mxu0 0.0
    %411 = vmatprep.subr.mxu0 0.0
    %412 = vmatpush1.msra.mxu0 0.0
    %413 = vmatprep.subr.mxu0 0.0
    %414 = vmatpush1.msra.mxu0 0.0
    %415 = vmatprep.subr.mxu0 0.0
    %416 = vmatpush1.msra.mxu0 0.0
    %417 = vmatprep.subr.mxu0 0.0
    %418 = vmatpush1.msra.mxu0 0.0
    %419 = vmatprep.subr.mxu0 0.0
    %420 = vmatpush1.msra.mxu0 0.0
    %421 = vmatprep.subr.mxu0 0.0
    %422 = vmatpush1.msra.mxu0 0.0
    %423 = vmatprep.subr.mxu0 0.0
    %424 = vmatpush1.msra.mxu0 0.0
    %425 = vmatprep.subr.mxu0 0.0
    %426 = vmatpush1.msra.mxu0 0.0
    %427 = vmatprep.subr.mxu0 0.0
    %428 = vmatpush1.msra.mxu0 0.0
    %429 = vmatprep.subr.mxu0 0.0
    %430 = vmatpush1.msra.mxu0 0.0
    %431 = vmatprep.subr.mxu0 0.0
    %432 = vmatpush1.msra.mxu0 0.0
    %433 = vmatprep.subr.mxu0 0.0
    %434 = vmatpush1.msra.mxu0 0.0
    %435 = vmatprep.mubr.f32.mxu0 0.0
    %436 = vmatmul.mubr.f32.gmra.mrb[0].mxu0 %v360
    %v437 = vpop.f32.mrb[0].mxu0
    %v438 = vadd.f32 0.0, %v437
    %v439 = vpop.f32.mrb[0].mxu0
    %440 = vmatprep.mubr.f32.mxu0 0.0
    %441 = vmatmul.mubr.f32.gmra.mrb[0].mxu0 %v363
    %v442 = vpop.f32.mrb[0].mxu0
    %v443 = vadd.f32 0.0, %v442
    %v444 = vpop.f32.mrb[0].mxu0
    %445 = vmatprep.mubr.f32.mxu0 0.0
    %446 = vmatmul.mubr.f32.gmra.mrb[0].mxu0 %v366
    %v447 = vpop.f32.mrb[0].mxu0
    %v448 = vadd.f32 0.0, %v447
    %v449 = vpop.f32.mrb[0].mxu0
    %450 = vmatprep.mubr.f32.mxu0 0.0
    %451 = vmatmul.mubr.f32.gmra.mrb[0].mxu0 %v369
    %v452 = vpop.f32.mrb[0].mxu0
    %v453 = vadd.f32 0.0, %v452
    %v454 = vpop.f32.mrb[0].mxu0
    %455 = vdwg.mxu0
    %456 = vst [vmem:[%s15] sm:$0xff] %v438
    %457 = vst [vmem:[%s15 + $0x8] sm:$0xff] %v443
    %458 = vst [vmem:[%s15 + $0x10] sm:$0xff] %v448
    %459 = vst [vmem:[%s15 + $0x18] sm:$0xff] %v453
    %v460 = vsel %vm358, %v312, 0
    %v462 = vsel %vm358, %v313, 0
    %v464 = vsel %vm358, %v321, 0
    %v466 = vsel %vm358, %v323, 0
    %468 = vmatprep.subr.mxu0 0.0
    %469 = vmatpush1.xpose.msra.mxu0 %v464
    %470 = vmatprep.subr.mxu0 0.0
    %471 = vmatpush1.xpose.msra.mxu0 %v466
    %472 = vmatprep.subr.mxu0 0.0
    %473 = vmatpush1.xpose.msra.mxu0 0.0
    %474 = vmatprep.subr.mxu0 0.0
    %475 = vmatpush1.xpose.msra.mxu0 0.0
    %476 = vmatprep.subr.mxu0 0.0
    %477 = vmatpush1.xpose.msra.mxu0 0.0
    %478 = vmatprep.subr.mxu0 0.0
    %479 = vmatpush1.xpose.msra.mxu0 0.0
    %480 = vmatprep.subr.mxu0 0.0
    %481 = vmatpush1.xpose.msra.mxu0 0.0
    %482 = vmatprep.subr.mxu0 0.0
    %483 = vmatpush1.xpose.msra.mxu0 0.0
    %484 = vmatprep.subr.mxu0 0.0
    %485 = vmatpush1.xpose.msra.mxu0 0.0
    %486 = vmatprep.subr.mxu0 0.0
    %487 = vmatpush1.xpose.msra.mxu0 0.0
    %488 = vmatprep.subr.mxu0 0.0
    %489 = vmatpush1.xpose.msra.mxu0 0.0
    %490 = vmatprep.subr.mxu0 0.0
    %491 = vmatpush1.xpose.msra.mxu0 0.0
    %492 = vmatprep.subr.mxu0 0.0
    %493 = vmatpush1.xpose.msra.mxu0 0.0
    %494 = vmatprep.subr.mxu0 0.0
    %495 = vmatpush1.xpose.msra.mxu0 0.0
    %496 = vmatprep.subr.mxu0 0.0
    %497 = vmatpush1.xpose.msra.mxu0 0.0
    %498 = vmatprep.subr.mxu0 0.0
    %499 = vmatpush1.xpose.msra.mxu0 0.0
    %500 = vmatprep.subr.mxu0 0.0
    %501 = vmatpush1.xpose.msra.mxu0 0.0
    %502 = vmatprep.subr.mxu0 0.0
    %503 = vmatpush1.xpose.msra.mxu0 0.0
    %504 = vmatprep.subr.mxu0 0.0
    %505 = vmatpush1.xpose.msra.mxu0 0.0
    %506 = vmatprep.subr.mxu0 0.0
    %507 = vmatpush1.xpose.msra.mxu0 0.0
    %508 = vmatprep.subr.mxu0 0.0
    %509 = vmatpush1.xpose.msra.mxu0 0.0
    %510 = vmatprep.subr.mxu0 0.0
    %511 = vmatpush1.xpose.msra.mxu0 0.0
    %512 = vmatprep.subr.mxu0 0.0
    %513 = vmatpush1.xpose.msra.mxu0 0.0
    %514 = vmatprep.subr.mxu0 0.0
    %515 = vmatpush1.xpose.msra.mxu0 0.0
    %516 = vmatprep.subr.mxu0 0.0
    %517 = vmatpush1.xpose.msra.mxu0 0.0
    %518 = vmatprep.subr.mxu0 0.0
    %519 = vmatpush1.xpose.msra.mxu0 0.0
    %520 = vmatprep.subr.mxu0 0.0
    %521 = vmatpush1.xpose.msra.mxu0 0.0
    %522 = vmatprep.subr.mxu0 0.0
    %523 = vmatpush1.xpose.msra.mxu0 0.0
    %524 = vmatprep.subr.mxu0 0.0
    %525 = vmatpush1.xpose.msra.mxu0 0.0
    %526 = vmatprep.subr.mxu0 0.0
    %527 = vmatpush1.xpose.msra.mxu0 0.0
    %528 = vmatprep.subr.mxu0 0.0
    %529 = vmatpush1.xpose.msra.mxu0 0.0
    %530 = vmatprep.subr.mxu0 0.0
    %531 = vmatpush1.xpose.msra.mxu0 0.0
    %532 = vmatprep.mubr.f32.mxu0 0.0
    %533 = vmatmul.mubr.f32.gmra.mrb[0].mxu0 %v460
    %v534 = vpop.f32.mrb[0].mxu0
    %v535 = vadd.f32 0.0, %v534
    %v536 = vpop.f32.mrb[0].mxu0
    %537 = vmatprep.mubr.f32.mxu0 0.0
    %538 = vmatmul.mubr.f32.gmra.mrb[0].mxu0 %v462
    %v539 = vpop.f32.mrb[0].mxu0
    %v540 = vadd.f32 0.0, %v539
    %v541 = vpop.f32.mrb[0].mxu0
    %542 = vdwg.mxu0
    %v543 = vld [vmem:[%s4] sm:$0xff]
    %v544 = vld [vmem:[%s4 + $0x8] sm:$0xff]
    %v545 = vmul.f32 %v535, %v543
    %v546 = vmul.f32 %v540, %v544
    %v547 = vsel %vm358, %v545, 0.0
    %548 = vadd.xlane.f32.xlu0 %v547
    %v549 = vpop.xlane.xlu0 %548
    %v550 = vsel %vm358, %v546, 0.0
    %551 = vadd.xlane.f32.xlu0 %v550
    %v552 = vpop.xlane.xlu0 %551
    %v553 = vand.u32 2147483647, %v549
    %v554 = vand.u32 2147483647, %v552
    %v555 = vmax.f32 %v553, 1.0
    %v556 = vmax.f32 %v554, 1.0
    %v557 = vrcp.pop %v555
    %v558 = vrcp.pop %v556
    %v559 = vmul.f32 %v545, %v557
    %v560 = vmul.f32 %v546, %v558
    %561 = vrot.lane.b32.xlu0 %v312, 64
    %v562 = vpop.permute.xlu0 %561
    %563 = vrot.lane.b32.xlu0 %v313, 64
    %v564 = vpop.permute.xlu0 %563
    %v568 = vsel %vm358, %v559, 0
    %v571 = vsel %vm358, %v560, 0
    %573 = vmatprep.subr.mxu0 0.0
    %574 = vmatpush1.msra.mxu0 %v562
    %575 = vmatprep.subr.mxu0 0.0
    %576 = vmatpush1.msra.mxu0 %v564
    %577 = vmatprep.subr.mxu0 0.0
    %578 = vmatpush1.msra.mxu0 0.0
    %579 = vmatprep.subr.mxu0 0.0
    %580 = vmatpush1.msra.mxu0 0.0
    %581 = vmatprep.subr.mxu0 0.0
    %582 = vmatpush1.msra.mxu0 0.0
    %583 = vmatprep.subr.mxu0 0.0
    %584 = vmatpush1.msra.mxu0 0.0
    %585 = vmatprep.subr.mxu0 0.0
    %586 = vmatpush1.msra.mxu0 0.0
    %587 = vmatprep.subr.mxu0 0.0
    %588 = vmatpush1.msra.mxu0 0.0
    %589 = vmatprep.subr.mxu0 0.0
    %590 = vmatpush1.msra.mxu0 0.0
    %591 = vmatprep.subr.mxu0 0.0
    %592 = vmatpush1.msra.mxu0 0.0
    %593 = vmatprep.subr.mxu0 0.0
    %594 = vmatpush1.msra.mxu0 0.0
    %595 = vmatprep.subr.mxu0 0.0
    %596 = vmatpush1.msra.mxu0 0.0
    %597 = vmatprep.subr.mxu0 0.0
    %598 = vmatpush1.msra.mxu0 0.0
    %599 = vmatprep.subr.mxu0 0.0
    %600 = vmatpush1.msra.mxu0 0.0
    %601 = vmatprep.subr.mxu0 0.0
    %602 = vmatpush1.msra.mxu0 0.0
    %603 = vmatprep.subr.mxu0 0.0
    %604 = vmatpush1.msra.mxu0 0.0
    %605 = vmatprep.subr.mxu0 0.0
    %606 = vmatpush1.msra.mxu0 0.0
    %607 = vmatprep.subr.mxu0 0.0
    %608 = vmatpush1.msra.mxu0 0.0
    %609 = vmatprep.subr.mxu0 0.0
    %610 = vmatpush1.msra.mxu0 0.0
    %611 = vmatprep.subr.mxu0 0.0
    %612 = vmatpush1.msra.mxu0 0.0
    %613 = vmatprep.subr.mxu0 0.0
    %614 = vmatpush1.msra.mxu0 0.0
    %615 = vmatprep.subr.mxu0 0.0
    %616 = vmatpush1.msra.mxu0 0.0
    %617 = vmatprep.subr.mxu0 0.0
    %618 = vmatpush1.msra.mxu0 0.0
    %619 = vmatprep.subr.mxu0 0.0
    %620 = vmatpush1.msra.mxu0 0.0
    %621 = vmatprep.subr.mxu0 0.0
    %622 = vmatpush1.msra.mxu0 0.0
    %623 = vmatprep.subr.mxu0 0.0
    %624 = vmatpush1.msra.mxu0 0.0
    %625 = vmatprep.subr.mxu0 0.0
    %626 = vmatpush1.msra.mxu0 0.0
    %627 = vmatprep.subr.mxu0 0.0
    %628 = vmatpush1.msra.mxu0 0.0
    %629 = vmatprep.subr.mxu0 0.0
    %630 = vmatpush1.msra.mxu0 0.0
    %631 = vmatprep.subr.mxu0 0.0
    %632 = vmatpush1.msra.mxu0 0.0
    %633 = vmatprep.subr.mxu0 0.0
    %634 = vmatpush1.msra.mxu0 0.0
    %635 = vmatprep.subr.mxu0 0.0
    %636 = vmatpush1.msra.mxu0 0.0
    %637 = vmatprep.mubr.f32.mxu0 0.0
    %638 = vmatmul.mubr.f32.gmra.mrb[0].mxu0 %v568
    %v639 = vpop.f32.mrb[0].mxu0
    %v640 = vadd.f32 0.0, %v639
    %v641 = vpop.f32.mrb[0].mxu0
    %642 = vmatprep.mubr.f32.mxu0 0.0
    %643 = vmatmul.mubr.f32.gmra.mrb[0].mxu0 %v571
    %v644 = vpop.f32.mrb[0].mxu0
    %v645 = vadd.f32 0.0, %v644
    %v646 = vpop.f32.mrb[0].mxu0
    %647 = vdwg.mxu0
    %v648 = vmul.f32 %v640, %v640
    %v649 = vmul.f32 %v645, %v645
    %v650 = vsel %vm110, %v648, 0.0
    %651 = vadd.xlane.f32.xlu0 %v650
    %v652 = vpop.xlane.xlu0 %651
    %v653 = vsel %vm110, %v649, 0.0
    %654 = vadd.xlane.f32.xlu0 %v653
    %v655 = vpop.xlane.xlu0 %654
    %v656 = vmul.f32 %v652, %v117
    %v657 = vmul.f32 %v655, %v117
    %v658 = vadd.f32 %v656, 1e-06
    %v659 = vadd.f32 %v657, 1e-06
    %v660 = vrsqrt.pop %v658
    %v661 = vrsqrt.pop %v659
    %v662 = vmul.f32 %v640, %v660
    %v663 = vmul.f32 %v645, %v661
    %664 = vst.msk [vmem:[#allocation2] sm:$0xff] %vm110, %v662
    %665 = vst.msk [vmem:[#allocation2 + $0x8] sm:$0xff] %vm110, %v663
    %666 = vrot.lane.b32.xlu0 %v312, 112
    %v667 = vpop.permute.xlu0 %666
    %668 = vrot.lane.b32.xlu0 %v313, 112
    %v669 = vpop.permute.xlu0 %668
    %670 = vrot.lane.b32.xlu0 %v312, 80
    %v671 = vpop.permute.xlu0 %670
    %672 = vrot.lane.b32.xlu0 %v313, 80
    %v673 = vpop.permute.xlu0 %672
    %v674 = vsel %vm358, %v667, 0
    %v676 = vsel %vm358, %v669, 0
    %v678 = vsel %vm358, %v671, 0
    %v680 = vsel %vm358, %v673, 0
    %682 = vmatprep.subr.mxu0 0.0
    %683 = vmatpush1.xpose.msra.mxu0 %v678
    %684 = vmatprep.subr.mxu0 0.0
    %685 = vmatpush1.xpose.msra.mxu0 %v680
    %686 = vmatprep.subr.mxu0 0.0
    %687 = vmatpush1.xpose.msra.mxu0 0.0
    %688 = vmatprep.subr.mxu0 0.0
    %689 = vmatpush1.xpose.msra.mxu0 0.0
    %690 = vmatprep.subr.mxu0 0.0
    %691 = vmatpush1.xpose.msra.mxu0 0.0
    %692 = vmatprep.subr.mxu0 0.0
    %693 = vmatpush1.xpose.msra.mxu0 0.0
    %694 = vmatprep.subr.mxu0 0.0
    %695 = vmatpush1.xpose.msra.mxu0 0.0
    %696 = vmatprep.subr.mxu0 0.0
    %697 = vmatpush1.xpose.msra.mxu0 0.0
    %698 = vmatprep.subr.mxu0 0.0
    %699 = vmatpush1.xpose.msra.mxu0 0.0
    %700 = vmatprep.subr.mxu0 0.0
    %701 = vmatpush1.xpose.msra.mxu0 0.0
    %702 = vmatprep.subr.mxu0 0.0
    %703 = vmatpush1.xpose.msra.mxu0 0.0
    %704 = vmatprep.subr.mxu0 0.0
    %705 = vmatpush1.xpose.msra.mxu0 0.0
    %706 = vmatprep.subr.mxu0 0.0
    %707 = vmatpush1.xpose.msra.mxu0 0.0
    %708 = vmatprep.subr.mxu0 0.0
    %709 = vmatpush1.xpose.msra.mxu0 0.0
    %710 = vmatprep.subr.mxu0 0.0
    %711 = vmatpush1.xpose.msra.mxu0 0.0
    %712 = vmatprep.subr.mxu0 0.0
    %713 = vmatpush1.xpose.msra.mxu0 0.0
    %714 = vmatprep.subr.mxu0 0.0
    %715 = vmatpush1.xpose.msra.mxu0 0.0
    %716 = vmatprep.subr.mxu0 0.0
    %717 = vmatpush1.xpose.msra.mxu0 0.0
    %718 = vmatprep.subr.mxu0 0.0
    %719 = vmatpush1.xpose.msra.mxu0 0.0
    %720 = vmatprep.subr.mxu0 0.0
    %721 = vmatpush1.xpose.msra.mxu0 0.0
    %722 = vmatprep.subr.mxu0 0.0
    %723 = vmatpush1.xpose.msra.mxu0 0.0
    %724 = vmatprep.subr.mxu0 0.0
    %725 = vmatpush1.xpose.msra.mxu0 0.0
    %726 = vmatprep.subr.mxu0 0.0
    %727 = vmatpush1.xpose.msra.mxu0 0.0
    %728 = vmatprep.subr.mxu0 0.0
    %729 = vmatpush1.xpose.msra.mxu0 0.0
    %730 = vmatprep.subr.mxu0 0.0
    %731 = vmatpush1.xpose.msra.mxu0 0.0
    %732 = vmatprep.subr.mxu0 0.0
    %733 = vmatpush1.xpose.msra.mxu0 0.0
    %734 = vmatprep.subr.mxu0 0.0
    %735 = vmatpush1.xpose.msra.mxu0 0.0
    %736 = vmatprep.subr.mxu0 0.0
    %737 = vmatpush1.xpose.msra.mxu0 0.0
    %738 = vmatprep.subr.mxu0 0.0
    %739 = vmatpush1.xpose.msra.mxu0 0.0
    %740 = vmatprep.subr.mxu0 0.0
    %741 = vmatpush1.xpose.msra.mxu0 0.0
    %742 = vmatprep.subr.mxu0 0.0
    %743 = vmatpush1.xpose.msra.mxu0 0.0
    %744 = vmatprep.subr.mxu0 0.0
    %745 = vmatpush1.xpose.msra.mxu0 0.0
    %746 = vmatprep.mubr.f32.mxu0 0.0
    %747 = vmatmul.mubr.f32.gmra.mrb[0].mxu0 %v674
    %v748 = vpop.f32.mrb[0].mxu0
    %v749 = vadd.f32 0.0, %v748
    %v750 = vpop.f32.mrb[0].mxu0
    %751 = vmatprep.mubr.f32.mxu0 0.0
    %752 = vmatmul.mubr.f32.gmra.mrb[0].mxu0 %v676
    %v753 = vpop.f32.mrb[0].mxu0
    %v754 = vadd.f32 0.0, %v753
    %v755 = vpop.f32.mrb[0].mxu0
    %756 = vdwg.mxu0
    %s757 = scalar_lea.vmem %s4, 16
    %v758 = vld [vmem:[%s757] sm:$0xff]
    %v759 = vld [vmem:[%s757 + $0x8] sm:$0xff]
    %v760 = vmul.f32 %v749, %v758
    %v761 = vmul.f32 %v754, %v759
    %v762 = vsel %vm358, %v760, 0.0
    %763 = vadd.xlane.f32.xlu0 %v762
    %v764 = vpop.xlane.xlu0 %763
    %v765 = vsel %vm358, %v761, 0.0
    %766 = vadd.xlane.f32.xlu0 %v765
    %v767 = vpop.xlane.xlu0 %766
    %v768 = vand.u32 2147483647, %v764
    %v769 = vand.u32 2147483647, %v767
    %v770 = vmax.f32 %v768, 1.0
    %v771 = vmax.f32 %v769, 1.0
    %v772 = vrcp.pop %v770
    %v773 = vrcp.pop %v771
    %v774 = vmul.f32 %v760, %v772
    %v775 = vmul.f32 %v761, %v773
    %776 = vrot.lane.b32.xlu0 %v312, 32
    %v777 = vpop.permute.xlu0 %776
    %778 = vrot.lane.b32.xlu0 %v313, 32
    %v779 = vpop.permute.xlu0 %778
    %v783 = vsel %vm358, %v774, 0
    %v786 = vsel %vm358, %v775, 0
    %788 = vmatprep.subr.mxu0 0.0
    %789 = vmatpush1.msra.mxu0 %v777
    %790 = vmatprep.subr.mxu0 0.0
    %791 = vmatpush1.msra.mxu0 %v779
    %792 = vmatprep.subr.mxu0 0.0
    %793 = vmatpush1.msra.mxu0 0.0
    %794 = vmatprep.subr.mxu0 0.0
    %795 = vmatpush1.msra.mxu0 0.0
    %796 = vmatprep.subr.mxu0 0.0
    %797 = vmatpush1.msra.mxu0 0.0
    %798 = vmatprep.subr.mxu0 0.0
    %799 = vmatpush1.msra.mxu0 0.0
    %800 = vmatprep.subr.mxu0 0.0
    %801 = vmatpush1.msra.mxu0 0.0
    %802 = vmatprep.subr.mxu0 0.0
    %803 = vmatpush1.msra.mxu0 0.0
    %804 = vmatprep.subr.mxu0 0.0
    %805 = vmatpush1.msra.mxu0 0.0
    %806 = vmatprep.subr.mxu0 0.0
    %807 = vmatpush1.msra.mxu0 0.0
    %808 = vmatprep.subr.mxu0 0.0
    %809 = vmatpush1.msra.mxu0 0.0
    %810 = vmatprep.subr.mxu0 0.0
    %811 = vmatpush1.msra.mxu0 0.0
    %812 = vmatprep.subr.mxu0 0.0
    %813 = vmatpush1.msra.mxu0 0.0
    %814 = vmatprep.subr.mxu0 0.0
    %815 = vmatpush1.msra.mxu0 0.0
    %816 = vmatprep.subr.mxu0 0.0
    %817 = vmatpush1.msra.mxu0 0.0
    %818 = vmatprep.subr.mxu0 0.0
    %819 = vmatpush1.msra.mxu0 0.0
    %820 = vmatprep.subr.mxu0 0.0
    %821 = vmatpush1.msra.mxu0 0.0
    %822 = vmatprep.subr.mxu0 0.0
    %823 = vmatpush1.msra.mxu0 0.0
    %824 = vmatprep.subr.mxu0 0.0
    %825 = vmatpush1.msra.mxu0 0.0
    %826 = vmatprep.subr.mxu0 0.0
    %827 = vmatpush1.msra.mxu0 0.0
    %828 = vmatprep.subr.mxu0 0.0
    %829 = vmatpush1.msra.mxu0 0.0
    %830 = vmatprep.subr.mxu0 0.0
    %831 = vmatpush1.msra.mxu0 0.0
    %832 = vmatprep.subr.mxu0 0.0
    %833 = vmatpush1.msra.mxu0 0.0
    %834 = vmatprep.subr.mxu0 0.0
    %835 = vmatpush1.msra.mxu0 0.0
    %836 = vmatprep.subr.mxu0 0.0
    %837 = vmatpush1.msra.mxu0 0.0
    %838 = vmatprep.subr.mxu0 0.0
    %839 = vmatpush1.msra.mxu0 0.0
    %840 = vmatprep.subr.mxu0 0.0
    %841 = vmatpush1.msra.mxu0 0.0
    %842 = vmatprep.subr.mxu0 0.0
    %843 = vmatpush1.msra.mxu0 0.0
    %844 = vmatprep.subr.mxu0 0.0
    %845 = vmatpush1.msra.mxu0 0.0
    %846 = vmatprep.subr.mxu0 0.0
    %847 = vmatpush1.msra.mxu0 0.0
    %848 = vmatprep.subr.mxu0 0.0
    %849 = vmatpush1.msra.mxu0 0.0
    %850 = vmatprep.subr.mxu0 0.0
    %851 = vmatpush1.msra.mxu0 0.0
    %852 = vmatprep.mubr.f32.mxu0 0.0
    %853 = vmatmul.mubr.f32.gmra.mrb[0].mxu0 %v783
    %v854 = vpop.f32.mrb[0].mxu0
    %v855 = vadd.f32 0.0, %v854
    %v856 = vpop.f32.mrb[0].mxu0
    %857 = vmatprep.mubr.f32.mxu0 0.0
    %858 = vmatmul.mubr.f32.gmra.mrb[0].mxu0 %v786
    %v859 = vpop.f32.mrb[0].mxu0
    %v860 = vadd.f32 0.0, %v859
    %v861 = vpop.f32.mrb[0].mxu0
    %862 = vdwg.mxu0
    %v863 = vmul.f32 %v855, %v855
    %v864 = vmul.f32 %v860, %v860
    %v865 = vsel %vm110, %v863, 0.0
    %866 = vadd.xlane.f32.xlu0 %v865
    %v867 = vpop.xlane.xlu0 %866
    %v868 = vsel %vm110, %v864, 0.0
    %869 = vadd.xlane.f32.xlu0 %v868
    %v870 = vpop.xlane.xlu0 %869
    %v871 = vmul.f32 %v867, %v117
    %v872 = vmul.f32 %v870, %v117
    %v873 = vadd.f32 %v871, 1e-06
    %v874 = vadd.f32 %v872, 1e-06
    %v875 = vrsqrt.pop %v873
    %v876 = vrsqrt.pop %v874
    %v877 = vmul.f32 %v855, %v875
    %v878 = vmul.f32 %v860, %v876
    %881 = vrot.lane.b32.xlu0 %v877, 32
    %v882 = vpop.permute.xlu0 %881
    %883 = vrot.lane.b32.xlu0 %v878, 32
    %v884 = vpop.permute.xlu0 %883
    %vm887 = vcmask 523520
    %888 = vst.msk [vmem:[#allocation2] sm:$0xff] %vm887, %v882
    %889 = vst.msk [vmem:[#allocation2 + $0x8] sm:$0xff] %vm887, %v884
    %v890 = vxor.u32 %v221, 2147483648
    %v891 = vxor.u32 %v227, 2147483648
    %v892 = vmul.f32 %v890, 1.442695
    %v893 = vpow.pop %v892
    %v894 = vmul.f32 %v891, 1.442695
    %v895 = vpow.pop %v894
    %v896 = vadd.f32 %v893, 1.0
    %v897 = vadd.f32 %v895, 1.0
    %v898 = vrcp.pop %v896
    %v899 = vmul.f32 1.0, %v898
    %v900 = vrcp.pop %v897
    %v901 = vmul.f32 1.0, %v900
    %v902 = vmul.f32 %v221, %v899
    %v903 = vmul.f32 %v227, %v901
    %v904 = vld [vmem:[#allocation2] sm:$0xff]
    %v905 = vld [vmem:[#allocation2 + $0x8] sm:$0xff]
    %908 = vrot.lane.b32.xlu0 %v904, 64
    %v909 = vpop.permute.xlu0 %908
    %910 = vrot.lane.b32.xlu0 %v905, 64
    %v911 = vpop.permute.xlu0 %910
    %v914 = vmul.f32 %v902, %v909
    %v915 = vmul.f32 %v903, %v911
    %v916 = vld [vmem:[%s7] sm:$0xff]
    %v917 = vld [vmem:[%s7 + $0x8] sm:$0xff]
    %v918 = vld [vmem:[%s7 + $0x10] sm:$0xff]
    %v919 = vld [vmem:[%s7 + $0x18] sm:$0xff]
    %v920 = vld [vmem:[%s7 + $0x20] sm:$0xff]
    %v921 = vld [vmem:[%s7 + $0x28] sm:$0xff]
    %v922 = vld [vmem:[%s7 + $0x30] sm:$0xff]
    %v923 = vld [vmem:[%s7 + $0x38] sm:$0xff]
    %926 = vrot.lane.b32.xlu0 %v914, 64
    %v927 = vpop.permute.xlu0 %926
    %928 = vrot.lane.b32.xlu0 %v915, 64
    %v929 = vpop.permute.xlu0 %928
    %vm930 = vcmask 523264
    %v931 = vsel %vm930, %v927, 0
    %v933 = vsel %vm930, %v929, 0
    %935 = vmatprep.subr.mxu0 0.0
    %936 = vmatpush1.msra.mxu0 %v916
    %937 = vmatprep.subr.mxu0 0.0
    %938 = vmatpush1.msra.mxu0 %v917
    %939 = vmatprep.subr.mxu0 0.0
    %940 = vmatpush1.msra.mxu0 %v918
    %941 = vmatprep.subr.mxu0 0.0
    %942 = vmatpush1.msra.mxu0 %v919
    %943 = vmatprep.subr.mxu0 0.0
    %944 = vmatpush1.msra.mxu0 %v920
    %945 = vmatprep.subr.mxu0 0.0
    %946 = vmatpush1.msra.mxu0 %v921
    %947 = vmatprep.subr.mxu0 0.0
    %948 = vmatpush1.msra.mxu0 %v922
    %949 = vmatprep.subr.mxu0 0.0
    %950 = vmatpush1.msra.mxu0 %v923
    %951 = vmatprep.subr.mxu0 0.0
    %952 = vmatpush1.msra.mxu0 0.0
    %953 = vmatprep.subr.mxu0 0.0
    %954 = vmatpush1.msra.mxu0 0.0
    %955 = vmatprep.subr.mxu0 0.0
    %956 = vmatpush1.msra.mxu0 0.0
    %957 = vmatprep.subr.mxu0 0.0
    %958 = vmatpush1.msra.mxu0 0.0
    %959 = vmatprep.subr.mxu0 0.0
    %960 = vmatpush1.msra.mxu0 0.0
    %961 = vmatprep.subr.mxu0 0.0
    %962 = vmatpush1.msra.mxu0 0.0
    %963 = vmatprep.subr.mxu0 0.0
    %964 = vmatpush1.msra.mxu0 0.0
    %965 = vmatprep.subr.mxu0 0.0
    %966 = vmatpush1.msra.mxu0 0.0
    %967 = vmatprep.subr.mxu0 0.0
    %968 = vmatpush1.msra.mxu0 0.0
    %969 = vmatprep.subr.mxu0 0.0
    %970 = vmatpush1.msra.mxu0 0.0
    %971 = vmatprep.subr.mxu0 0.0
    %972 = vmatpush1.msra.mxu0 0.0
    %973 = vmatprep.subr.mxu0 0.0
    %974 = vmatpush1.msra.mxu0 0.0
    %975 = vmatprep.subr.mxu0 0.0
    %976 = vmatpush1.msra.mxu0 0.0
    %977 = vmatprep.subr.mxu0 0.0
    %978 = vmatpush1.msra.mxu0 0.0
    %979 = vmatprep.subr.mxu0 0.0
    %980 = vmatpush1.msra.mxu0 0.0
    %981 = vmatprep.subr.mxu0 0.0
    %982 = vmatpush1.msra.mxu0 0.0
    %983 = vmatprep.subr.mxu0 0.0
    %984 = vmatpush1.msra.mxu0 0.0
    %985 = vmatprep.subr.mxu0 0.0
    %986 = vmatpush1.msra.mxu0 0.0
    %987 = vmatprep.subr.mxu0 0.0
    %988 = vmatpush1.msra.mxu0 0.0
    %989 = vmatprep.subr.mxu0 0.0
    %990 = vmatpush1.msra.mxu0 0.0
    %991 = vmatprep.subr.mxu0 0.0
    %992 = vmatpush1.msra.mxu0 0.0
    %993 = vmatprep.subr.mxu0 0.0
    %994 = vmatpush1.msra.mxu0 0.0
    %995 = vmatprep.subr.mxu0 0.0
    %996 = vmatpush1.msra.mxu0 0.0
    %997 = vmatprep.subr.mxu0 0.0
    %998 = vmatpush1.msra.mxu0 0.0
    %999 = vmatprep.mubr.f32.mxu0 0.0
    %1000 = vmatmul.mubr.f32.gmra.mrb[0].mxu0 %v931
    %v1001 = vpop.f32.mrb[0].mxu0
    %v1002 = vadd.f32 0.0, %v1001
    %v1003 = vpop.f32.mrb[0].mxu0
    %1004 = vmatprep.mubr.f32.mxu0 0.0
    %1005 = vmatmul.mubr.f32.gmra.mrb[0].mxu0 %v933
    %v1006 = vpop.f32.mrb[0].mxu0
    %v1007 = vadd.f32 0.0, %v1006
    %v1008 = vpop.f32.mrb[0].mxu0
    %1009 = vdwg.mxu0
    %v1010 = vld [vmem:[%s1] sm:$0xff]
    %v1011 = vld [vmem:[%s1 + $0x8] sm:$0xff]
    %v1012 = vld [vmem:[%s10] sm:$0xff]
    %v1013 = vld [vmem:[%s10 + $0x8] sm:$0xff]
    %v1014 = vld [vmem:[%s10 + $0x10] sm:$0xff]
    %v1015 = vld [vmem:[%s10 + $0x18] sm:$0xff]
    %v1016 = vld [vmem:[%s11] sm:$0x1]
    %v1018 = vlaneseq
    %v1019 = vshrl.u32 %v1018, 7
    %v1020 = vsub.s32 0, %v1019
    %v1021 = vrot.slane %v1016, %v1020
    %v1024 = vsel %vm110, %v1010, 0
    %v1027 = vsel %vm110, %v1011, 0
    %1029 = vmatprep.subr.mxu0 0.0
    %1030 = vmatpush1.msra.mxu0 %v1012
    %1031 = vmatprep.subr.mxu0 0.0
    %1032 = vmatpush1.msra.mxu0 %v1013
    %1033 = vmatprep.subr.mxu0 0.0
    %1034 = vmatpush1.msra.mxu0 %v1014
    %1035 = vmatprep.subr.mxu0 0.0
    %1036 = vmatpush1.msra.mxu0 %v1015
    %1037 = vmatprep.subr.mxu0 0.0
    %1038 = vmatpush1.msra.mxu0 0.0
    %1039 = vmatprep.subr.mxu0 0.0
    %1040 = vmatpush1.msra.mxu0 0.0
    %1041 = vmatprep.subr.mxu0 0.0
    %1042 = vmatpush1.msra.mxu0 0.0
    %1043 = vmatprep.subr.mxu0 0.0
    %1044 = vmatpush1.msra.mxu0 0.0
    %1045 = vmatprep.subr.mxu0 0.0
    %1046 = vmatpush1.msra.mxu0 0.0
    %1047 = vmatprep.subr.mxu0 0.0
    %1048 = vmatpush1.msra.mxu0 0.0
    %1049 = vmatprep.subr.mxu0 0.0
    %1050 = vmatpush1.msra.mxu0 0.0
    %1051 = vmatprep.subr.mxu0 0.0
    %1052 = vmatpush1.msra.mxu0 0.0
    %1053 = vmatprep.subr.mxu0 0.0
    %1054 = vmatpush1.msra.mxu0 0.0
    %1055 = vmatprep.subr.mxu0 0.0
    %1056 = vmatpush1.msra.mxu0 0.0
    %1057 = vmatprep.subr.mxu0 0.0
    %1058 = vmatpush1.msra.mxu0 0.0
    %1059 = vmatprep.subr.mxu0 0.0
    %1060 = vmatpush1.msra.mxu0 0.0
    %1061 = vmatprep.subr.mxu0 0.0
    %1062 = vmatpush1.msra.mxu0 0.0
    %1063 = vmatprep.subr.mxu0 0.0
    %1064 = vmatpush1.msra.mxu0 0.0
    %1065 = vmatprep.subr.mxu0 0.0
    %1066 = vmatpush1.msra.mxu0 0.0
    %1067 = vmatprep.subr.mxu0 0.0
    %1068 = vmatpush1.msra.mxu0 0.0
    %1069 = vmatprep.subr.mxu0 0.0
    %1070 = vmatpush1.msra.mxu0 0.0
    %1071 = vmatprep.subr.mxu0 0.0
    %1072 = vmatpush1.msra.mxu0 0.0
    %1073 = vmatprep.subr.mxu0 0.0
    %1074 = vmatpush1.msra.mxu0 0.0
    %1075 = vmatprep.subr.mxu0 0.0
    %1076 = vmatpush1.msra.mxu0 0.0
    %1077 = vmatprep.subr.mxu0 0.0
    %1078 = vmatpush1.msra.mxu0 0.0
    %1079 = vmatprep.subr.mxu0 0.0
    %1080 = vmatpush1.msra.mxu0 0.0
    %1081 = vmatprep.subr.mxu0 0.0
    %1082 = vmatpush1.msra.mxu0 0.0
    %1083 = vmatprep.subr.mxu0 0.0
    %1084 = vmatpush1.msra.mxu0 0.0
    %1085 = vmatprep.subr.mxu0 0.0
    %1086 = vmatpush1.msra.mxu0 0.0
    %1087 = vmatprep.subr.mxu0 0.0
    %1088 = vmatpush1.msra.mxu0 0.0
    %1089 = vmatprep.subr.mxu0 0.0
    %1090 = vmatpush1.msra.mxu0 0.0
    %1091 = vmatprep.subr.mxu0 0.0
    %1092 = vmatpush1.msra.mxu0 0.0
    %1093 = vmatprep.mubr.f32.mxu0 0.0
    %1094 = vmatmul.mubr.f32.gmra.mrb[0].mxu0 %v1024
    %v1095 = vpop.f32.mrb[0].mxu0
    %v1096 = vadd.f32 %v1021, %v1095
    %v1097 = vpop.f32.mrb[0].mxu0
    %1098 = vmatprep.mubr.f32.mxu0 0.0
    %1099 = vmatmul.mubr.f32.gmra.mrb[0].mxu0 %v1027
    %v1100 = vpop.f32.mrb[0].mxu0
    %v1101 = vadd.f32 %v1021, %v1100
    %v1102 = vpop.f32.mrb[0].mxu0
    %1103 = vdwg.mxu0
    %v1104 = vadd.f32 %v105, %v1002
    %v1105 = vadd.f32 %v106, %v1007
    %v1106 = vsel %vm110, %v1104, 0.0
    %1107 = vadd.xlane.f32.xlu0 %v1106
    %v1108 = vpop.xlane.xlu0 %1107
    %v1109 = vsel %vm110, %v1105, 0.0
    %1110 = vadd.xlane.f32.xlu0 %v1109
    %v1111 = vpop.xlane.xlu0 %1110
    %v1112 = vmul.f32 %v1108, %v117
    %v1113 = vmul.f32 %v1111, %v117
    %v1114 = vsub.f32 %v1104, %v1112
    %v1115 = vsub.f32 %v1105, %v1113
    %v1116 = vmul.f32 %v1114, %v1114
    %v1117 = vmul.f32 %v1115, %v1115
    %v1118 = vsel %vm110, %v1116, 0.0
    %1119 = vadd.xlane.f32.xlu0 %v1118
    %v1120 = vpop.xlane.xlu0 %1119
    %v1121 = vsel %vm110, %v1117, 0.0
    %1122 = vadd.xlane.f32.xlu0 %v1121
    %v1123 = vpop.xlane.xlu0 %1122
    %v1124 = vmul.f32 %v1120, %v117
    %v1125 = vmul.f32 %v1123, %v117
    %v1126 = vadd.f32 %v1124, 1e-05
    %v1127 = vadd.f32 %v1125, 1e-05
    %v1128 = vrsqrt.pop %v1126
    %v1129 = vrsqrt.pop %v1127
    %v1130 = vmul.f32 %v1114, %v1128
    %v1131 = vmul.f32 %v1115, %v1129
    %v1132 = vmul.f32 %v1096, %v1130
    %v1133 = vmul.f32 %v1101, %v1131
    %1136 = vrot.lane.b32.xlu0 %v1096, 96
    %v1137 = vpop.permute.xlu0 %1136
    %1138 = vrot.lane.b32.xlu0 %v1101, 96
    %v1139 = vpop.permute.xlu0 %1138
    %v1142 = vadd.f32 %v1132, %v1137
    %v1143 = vadd.f32 %v1133, %v1139
    %v1144 = vld [vmem:[%s9] sm:$0x1]
    %v1145 = vmul.f32 %v1142, %v1142
    %v1146 = vmul.f32 %v1143, %v1143
    %v1147 = vsel %vm110, %v1145, 0.0
    %1148 = vadd.xlane.f32.xlu0 %v1147
    %v1149 = vpop.xlane.xlu0 %1148
    %v1150 = vsel %vm110, %v1146, 0.0
    %1151 = vadd.xlane.f32.xlu0 %v1150
    %v1152 = vpop.xlane.xlu0 %1151
    %v1153 = vmul.f32 %v1149, %v117
    %v1154 = vmul.f32 %v1152, %v117
    %v1155 = vadd.f32 %v1153, 1e-06
    %v1156 = vadd.f32 %v1154, 1e-06
    %v1157 = vrsqrt.pop %v1155
    %v1158 = vrsqrt.pop %v1156
    %v1159 = vmul.f32 %v1142, %v1157
    %v1160 = vmul.f32 %v1143, %v1158
    %v1162 = vlaneseq
    %v1163 = vshrl.u32 %v1162, 7
    %v1164 = vsub.s32 0, %v1163
    %v1165 = vrot.slane %v1144, %v1164
    %v1167 = vmul.f32 %v1159, %v1165
    %v1168 = vmul.f32 %v1160, %v1165
    %v1169 = vld [vmem:[#allocation9] sm:$0xff]
    %v1170 = vld [vmem:[#allocation9 + $0x8] sm:$0xff]
    %v1171 = vld [vmem:[#allocation9 + $0x10] sm:$0xff]
    %v1172 = vld [vmem:[#allocation9 + $0x18] sm:$0xff]
    %v1174 = vsel %vm110, %v1167, 0
    %v1177 = vsel %vm110, %v1168, 0
    %1179 = vmatprep.subr.mxu0 0.0
    %1180 = vmatpush1.msra.mxu0 %v1169
    %1181 = vmatprep.subr.mxu0 0.0
    %1182 = vmatpush1.msra.mxu0 %v1170
    %1183 = vmatprep.subr.mxu0 0.0
    %1184 = vmatpush1.msra.mxu0 %v1171
    %1185 = vmatprep.subr.mxu0 0.0
    %1186 = vmatpush1.msra.mxu0 %v1172
    %1187 = vmatprep.subr.mxu0 0.0
    %1188 = vmatpush1.msra.mxu0 0.0
    %1189 = vmatprep.subr.mxu0 0.0
    %1190 = vmatpush1.msra.mxu0 0.0
    %1191 = vmatprep.subr.mxu0 0.0
    %1192 = vmatpush1.msra.mxu0 0.0
    %1193 = vmatprep.subr.mxu0 0.0
    %1194 = vmatpush1.msra.mxu0 0.0
    %1195 = vmatprep.subr.mxu0 0.0
    %1196 = vmatpush1.msra.mxu0 0.0
    %1197 = vmatprep.subr.mxu0 0.0
    %1198 = vmatpush1.msra.mxu0 0.0
    %1199 = vmatprep.subr.mxu0 0.0
    %1200 = vmatpush1.msra.mxu0 0.0
    %1201 = vmatprep.subr.mxu0 0.0
    %1202 = vmatpush1.msra.mxu0 0.0
    %1203 = vmatprep.subr.mxu0 0.0
    %1204 = vmatpush1.msra.mxu0 0.0
    %1205 = vmatprep.subr.mxu0 0.0
    %1206 = vmatpush1.msra.mxu0 0.0
    %1207 = vmatprep.subr.mxu0 0.0
    %1208 = vmatpush1.msra.mxu0 0.0
    %1209 = vmatprep.subr.mxu0 0.0
    %1210 = vmatpush1.msra.mxu0 0.0
    %1211 = vmatprep.subr.mxu0 0.0
    %1212 = vmatpush1.msra.mxu0 0.0
    %1213 = vmatprep.subr.mxu0 0.0
    %1214 = vmatpush1.msra.mxu0 0.0
    %1215 = vmatprep.subr.mxu0 0.0
    %1216 = vmatpush1.msra.mxu0 0.0
    %1217 = vmatprep.subr.mxu0 0.0
    %1218 = vmatpush1.msra.mxu0 0.0
    %1219 = vmatprep.subr.mxu0 0.0
    %1220 = vmatpush1.msra.mxu0 0.0
    %1221 = vmatprep.subr.mxu0 0.0
    %1222 = vmatpush1.msra.mxu0 0.0
    %1223 = vmatprep.subr.mxu0 0.0
    %1224 = vmatpush1.msra.mxu0 0.0
    %1225 = vmatprep.subr.mxu0 0.0
    %1226 = vmatpush1.msra.mxu0 0.0
    %1227 = vmatprep.subr.mxu0 0.0
    %1228 = vmatpush1.msra.mxu0 0.0
    %1229 = vmatprep.subr.mxu0 0.0
    %1230 = vmatpush1.msra.mxu0 0.0
    %1231 = vmatprep.subr.mxu0 0.0
    %1232 = vmatpush1.msra.mxu0 0.0
    %1233 = vmatprep.subr.mxu0 0.0
    %1234 = vmatpush1.msra.mxu0 0.0
    %1235 = vmatprep.subr.mxu0 0.0
    %1236 = vmatpush1.msra.mxu0 0.0
    %1237 = vmatprep.subr.mxu0 0.0
    %1238 = vmatpush1.msra.mxu0 0.0
    %1239 = vmatprep.subr.mxu0 0.0
    %1240 = vmatpush1.msra.mxu0 0.0
    %1241 = vmatprep.subr.mxu0 0.0
    %1242 = vmatpush1.msra.mxu0 0.0
    %1243 = vmatprep.mubr.f32.mxu0 0.0
    %1244 = vmatmul.mubr.f32.gmra.mrb[0].mxu0 %v1174
    %v1245 = vpop.f32.mrb[0].mxu0
    %v1246 = vadd.f32 0.0, %v1245
    %v1247 = vpop.f32.mrb[0].mxu0
    %1248 = vmatprep.mubr.f32.mxu0 0.0
    %1249 = vmatmul.mubr.f32.gmra.mrb[0].mxu0 %v1177
    %v1250 = vpop.f32.mrb[0].mxu0
    %v1251 = vadd.f32 0.0, %v1250
    %v1252 = vpop.f32.mrb[0].mxu0
    %1253 = vdwg.mxu0
    %v1254 = vxor.u32 %v1246, 2147483648
    %v1255 = vxor.u32 %v1251, 2147483648
    %v1256 = vmul.f32 %v1254, 1.442695
    %v1257 = vpow.pop %v1256
    %v1258 = vmul.f32 %v1255, 1.442695
    %v1259 = vpow.pop %v1258
    %v1260 = vadd.f32 %v1257, 1.0
    %v1261 = vadd.f32 %v1259, 1.0
    %v1262 = vrcp.pop %v1260
    %v1263 = vmul.f32 1.0, %v1262
    %v1264 = vrcp.pop %v1261
    %v1265 = vmul.f32 1.0, %v1264
    %v1266 = vmul.f32 %v1246, %v1263
    %v1267 = vmul.f32 %v1251, %v1265
    %1270 = vrot.lane.b32.xlu0 %v1246, 64
    %v1271 = vpop.permute.xlu0 %1270
    %1272 = vrot.lane.b32.xlu0 %v1251, 64
    %v1273 = vpop.permute.xlu0 %1272
    %v1276 = vmul.f32 %v1266, %v1271
    %v1277 = vmul.f32 %v1267, %v1273
    %v1278 = vld [vmem:[%s13] sm:$0xff]
    %v1279 = vld [vmem:[%s13 + $0x8] sm:$0xff]
    %v1280 = vld [vmem:[%s13 + $0x10] sm:$0xff]
    %v1281 = vld [vmem:[%s13 + $0x18] sm:$0xff]
    %v1282 = vld [vmem:[%s13 + $0x20] sm:$0xff]
    %v1283 = vld [vmem:[%s13 + $0x28] sm:$0xff]
    %v1284 = vld [vmem:[%s13 + $0x30] sm:$0xff]
    %v1285 = vld [vmem:[%s13 + $0x38] sm:$0xff]
    %1288 = vrot.lane.b32.xlu0 %v1276, 64
    %v1289 = vpop.permute.xlu0 %1288
    %1290 = vrot.lane.b32.xlu0 %v1277, 64
    %v1291 = vpop.permute.xlu0 %1290
    %v1292 = vsel %vm930, %v1289, 0
    %v1294 = vsel %vm930, %v1291, 0
    %1296 = vmatprep.subr.mxu0 0.0
    %1297 = vmatpush1.msra.mxu0 %v1278
    %1298 = vmatprep.subr.mxu0 0.0
    %1299 = vmatpush1.msra.mxu0 %v1279
    %1300 = vmatprep.subr.mxu0 0.0
    %1301 = vmatpush1.msra.mxu0 %v1280
    %1302 = vmatprep.subr.mxu0 0.0
    %1303 = vmatpush1.msra.mxu0 %v1281
    %1304 = vmatprep.subr.mxu0 0.0
    %1305 = vmatpush1.msra.mxu0 %v1282
    %1306 = vmatprep.subr.mxu0 0.0
    %1307 = vmatpush1.msra.mxu0 %v1283
    %1308 = vmatprep.subr.mxu0 0.0
    %1309 = vmatpush1.msra.mxu0 %v1284
    %1310 = vmatprep.subr.mxu0 0.0
    %1311 = vmatpush1.msra.mxu0 %v1285
    %1312 = vmatprep.subr.mxu0 0.0
    %1313 = vmatpush1.msra.mxu0 0.0
    %1314 = vmatprep.subr.mxu0 0.0
    %1315 = vmatpush1.msra.mxu0 0.0
    %1316 = vmatprep.subr.mxu0 0.0
    %1317 = vmatpush1.msra.mxu0 0.0
    %1318 = vmatprep.subr.mxu0 0.0
    %1319 = vmatpush1.msra.mxu0 0.0
    %1320 = vmatprep.subr.mxu0 0.0
    %1321 = vmatpush1.msra.mxu0 0.0
    %1322 = vmatprep.subr.mxu0 0.0
    %1323 = vmatpush1.msra.mxu0 0.0
    %1324 = vmatprep.subr.mxu0 0.0
    %1325 = vmatpush1.msra.mxu0 0.0
    %1326 = vmatprep.subr.mxu0 0.0
    %1327 = vmatpush1.msra.mxu0 0.0
    %1328 = vmatprep.subr.mxu0 0.0
    %1329 = vmatpush1.msra.mxu0 0.0
    %1330 = vmatprep.subr.mxu0 0.0
    %1331 = vmatpush1.msra.mxu0 0.0
    %1332 = vmatprep.subr.mxu0 0.0
    %1333 = vmatpush1.msra.mxu0 0.0
    %1334 = vmatprep.subr.mxu0 0.0
    %1335 = vmatpush1.msra.mxu0 0.0
    %1336 = vmatprep.subr.mxu0 0.0
    %1337 = vmatpush1.msra.mxu0 0.0
    %1338 = vmatprep.subr.mxu0 0.0
    %1339 = vmatpush1.msra.mxu0 0.0
    %1340 = vmatprep.subr.mxu0 0.0
    %1341 = vmatpush1.msra.mxu0 0.0
    %1342 = vmatprep.subr.mxu0 0.0
    %1343 = vmatpush1.msra.mxu0 0.0
    %1344 = vmatprep.subr.mxu0 0.0
    %1345 = vmatpush1.msra.mxu0 0.0
    %1346 = vmatprep.subr.mxu0 0.0
    %1347 = vmatpush1.msra.mxu0 0.0
    %1348 = vmatprep.subr.mxu0 0.0
    %1349 = vmatpush1.msra.mxu0 0.0
    %1350 = vmatprep.subr.mxu0 0.0
    %1351 = vmatpush1.msra.mxu0 0.0
    %1352 = vmatprep.subr.mxu0 0.0
    %1353 = vmatpush1.msra.mxu0 0.0
    %1354 = vmatprep.subr.mxu0 0.0
    %1355 = vmatpush1.msra.mxu0 0.0
    %1356 = vmatprep.subr.mxu0 0.0
    %1357 = vmatpush1.msra.mxu0 0.0
    %1358 = vmatprep.subr.mxu0 0.0
    %1359 = vmatpush1.msra.mxu0 0.0
    %1360 = vmatprep.mubr.f32.mxu0 0.0
    %1361 = vmatmul.mubr.f32.gmra.mrb[0].mxu0 %v1292
    %v1362 = vpop.f32.mrb[0].mxu0
    %v1363 = vadd.f32 0.0, %v1362
    %v1364 = vpop.f32.mrb[0].mxu0
    %1365 = vmatprep.mubr.f32.mxu0 0.0
    %1366 = vmatmul.mubr.f32.gmra.mrb[0].mxu0 %v1294
    %v1367 = vpop.f32.mrb[0].mxu0
    %v1368 = vadd.f32 0.0, %v1367
    %v1369 = vpop.f32.mrb[0].mxu0
    %1370 = vdwg.mxu0
    %v1371 = vadd.f32 %v1142, %v1363
    %v1372 = vadd.f32 %v1143, %v1368
    %v1373 = vsel %vm110, %v1371, 0.0
    %1374 = vadd.xlane.f32.xlu0 %v1373
    %v1375 = vpop.xlane.xlu0 %1374
    %v1376 = vsel %vm110, %v1372, 0.0
    %1377 = vadd.xlane.f32.xlu0 %v1376
    %v1378 = vpop.xlane.xlu0 %1377
    %v1379 = vmul.f32 %v1375, %v117
    %v1380 = vmul.f32 %v1378, %v117
    %v1381 = vsub.f32 %v1371, %v1379
    %v1382 = vsub.f32 %v1372, %v1380
    %v1383 = vmul.f32 %v1381, %v1381
    %v1384 = vmul.f32 %v1382, %v1382
    %v1385 = vsel %vm110, %v1383, 0.0
    %1386 = vadd.xlane.f32.xlu0 %v1385
    %v1387 = vpop.xlane.xlu0 %1386
    %v1388 = vsel %vm110, %v1384, 0.0
    %1389 = vadd.xlane.f32.xlu0 %v1388
    %v1390 = vpop.xlane.xlu0 %1389
    %v1391 = vmul.f32 %v1387, %v117
    %v1392 = vmul.f32 %v1390, %v117
    %v1393 = vadd.f32 %v1391, 1e-05
    %v1394 = vadd.f32 %v1392, 1e-05
    %v1395 = vrsqrt.pop %v1393
    %v1396 = vrsqrt.pop %v1394
    %v1397 = vmul.f32 %v1381, %v1395
    %v1398 = vmul.f32 %v1382, %v1396
    %1401 = vrot.lane.b32.xlu0 %v1397, 64
    %v1402 = vpop.permute.xlu0 %1401
    %1403 = vrot.lane.b32.xlu0 %v1398, 64
    %v1404 = vpop.permute.xlu0 %1403
    %v1407 = vmul.f32 %v1096, %v1402
    %v1408 = vmul.f32 %v1101, %v1404
    %v1409 = vadd.f32 %v1407, %v1137
    %v1410 = vadd.f32 %v1408, %v1139
    %1413 = vrot.lane.b32.xlu0 %v1409, 64
    %v1414 = vpop.permute.xlu0 %1413
    %1415 = vrot.lane.b32.xlu0 %v1410, 64
    %v1416 = vpop.permute.xlu0 %1415
    %1419 = vst.msk [vmem:[#allocation11] sm:$0xff] %vm110, %v1414
    %1420 = vst.msk [vmem:[#allocation11 + $0x8] sm:$0xff] %vm110, %v1416
    // Predicated region
    $region74: #{retnet_decoder_layer.1} parent=1 // pred_check
      _
    $region75: #{retnet_decoder_layer.1} parent=1 // pred_check_branch
      %1422 = sbr.rel (0) target = $region77
    $region76: #{retnet_decoder_layer.1} parent=1 // pred_region
      %s1424 = ssub.s32 256, 256
      %1425 = vsyncadd [#allocation5], %s1424
      %s1426 = sshll.u32 [#allocation11], 4
      %s1427 = int_to_ptr.vmem [resolvable:$true] %s1426
      %1432 = dma.vmem_to_hbm [thread:$0]  %s1427, 256, %s14, [#allocation5], 128, 128, 8
    $region77: #{retnet_decoder_layer.1} parent=1 // pred_fallthru
      _
    // Predicated region
    $region78: #{retnet_decoder_layer.1} parent=1 // pred_check
      _
    $region79: #{retnet_decoder_layer.1} parent=1 // pred_check_branch
      %1434 = sbr.rel (0) target = $region81
    $region80: #{retnet_decoder_layer.1} parent=1 // pred_region
      _
    $region81: #{retnet_decoder_layer.1} parent=1 // pred_fallthru
      _
    // Predicated region
    $region82: #{retnet_decoder_layer.1} parent=1 // pred_check
      _
    $region83: #{retnet_decoder_layer.1} parent=1 // pred_check_branch
      %1436 = sbr.rel (0) target = $region85
    $region84: #{retnet_decoder_layer.1} parent=1 // pred_region
      %1437 = dma.done [#allocation5], 256
    $region85: #{retnet_decoder_layer.1} parent=1 // pred_fallthru
      _
    // Predicated region
    $region86: #{retnet_decoder_layer.1} parent=1 // pred_check
      _
    $region87: #{retnet_decoder_layer.1} parent=1 // pred_check_branch
      %1439 = sbr.rel (0) target = $region89
    $region88: #{retnet_decoder_layer.1} parent=1 // pred_region
      _
    $region89: #{retnet_decoder_layer.1} parent=1 // pred_fallthru
      _
    %1440 = vsyncpa [#allocation4], 1
    %1441 = vsyncpa [#allocation7], 1
    %1442 = vsyncpa [#allocation10], 1
    %1443 = vsyncpa [#allocation5], 1

</llo_original>
